<compile_context>
chip_gen: v7x
topology: tpu7x:2x2x1
jax: 0.10.0
libtpu: 0.0.40
codegen_flags: <defaults>
</compile_context>

<pallas_src>
import functools

import jax
import jax.numpy as jnp
from jax import lax
from jax.experimental import pallas as pl
from jax.experimental.pallas import tpu as pltpu


def _cross_attention_kernel(x_ref, emb_ref, wq_ref, wkv_ref, wp_ref, bp_ref,
                            out_ref, *, batch, n_q, n_kv, n_heads, head_dim,
                            qk_scale, compute_dtype):
    q_dim = n_heads * head_dim

    x = x_ref[...]        # (batch*n_q, q_dim)   original dtype (f32)
    emb = emb_ref[...]    # (batch*n_kv, k_dim)

    xc = x.astype(compute_dtype)
    ec = emb.astype(compute_dtype)

    # Projections on the flattened (batch*seq) M axis. K/V fused into one
    # wide matmul (k_dim -> 2*q_dim), f32 accumulation on the MXU.
    # qk scale folded into Q here (cheaper than scaling the score tiles).
    q = jnp.dot(xc, wq_ref[...], preferred_element_type=jnp.float32) * qk_scale
    kv = jnp.dot(ec, wkv_ref[...], preferred_element_type=jnp.float32)   # (B*e_N, 2*q_dim)
    k = kv[:, :q_dim]
    v = kv[:, q_dim:]

    wp = wp_ref[...]      # (q_dim, q_dim) in compute_dtype

    # Residual + projection bias seed the f32 accumulator; each head's
    # output-projection contribution is accumulated into it (no concatenate).
    acc = x.astype(jnp.float32) + bp_ref[...]

    # Per-head attention, batched over the batch dimension with dot_general
    # (contraction on the last dims -> no materialized transpose of K).
    # Python loop is unrolled at trace time (static lane slices per head).
    for h in range(n_heads):
        lo = h * head_dim
        qh = q[:, lo:lo + head_dim].reshape(batch, n_q, head_dim).astype(compute_dtype)
        kh = k[:, lo:lo + head_dim].reshape(batch, n_kv, head_dim).astype(compute_dtype)
        vh = v[:, lo:lo + head_dim].reshape(batch, n_kv, head_dim).astype(compute_dtype)

        # s[b, n, j] = sum_d q[b, n, d] * k[b, j, d]
        s = lax.dot_general(qh, kh, (((2,), (2,)), ((0,), (0,))),
                            preferred_element_type=jnp.float32)           # (B, N, e_N)

        # Numerically stable softmax over the key axis; reciprocal on the EUP.
        s_max = jnp.max(s, axis=-1, keepdims=True)
        p = jnp.exp(s - s_max)
        p_sum = jnp.sum(p, axis=-1, keepdims=True)
        p = p * pl.reciprocal(p_sum, approx=True)

        # o[b, n, d] = sum_j p[b, n, j] * v[b, j, d]
        oh = lax.dot_general(p.astype(compute_dtype), vh,
                             (((2,), (1,)), ((0,), (0,))),
                             preferred_element_type=jnp.float32)           # (B, N, D)
        oh2d = oh.reshape(batch * n_q, head_dim).astype(compute_dtype)

        # concat_h(o_h) @ Wp  ==  sum_h  o_h @ Wp[h*D:(h+1)*D, :]
        acc = acc + jnp.dot(oh2d, wp[lo:lo + head_dim, :],
                            preferred_element_type=jnp.float32)

    out_ref[...] = acc.astype(out_ref.dtype)


def cross_attention(x, embedding, params, *, n_heads, qk_scale=None,
                    compute_dtype=jnp.float32, batch_block=None):
    """x: (BS, N, q_dim), embedding: (BS, e_N, k_dim) -> (BS, N, q_dim).

    compute_dtype: operand dtype fed to the MXU (use jnp.bfloat16 on v6e/v7x).
    batch_block:   batch elements per grid step (default: all of them — one
                   grid step; set BS//2 on v7x to occupy both TensorCores;
                   when < BS, (batch_block*N, q_dim) must satisfy the (8,128)
                   tiling constraint).
    """
    BS, N, q_dim = x.shape
    _, e_N, k_dim = embedding.shape
    assert q_dim % n_heads == 0
    head_dim = q_dim // n_heads
    scale = qk_scale if qk_scale is not None else head_dim ** (-0.5)

    if batch_block is None:
        batch_block = BS            # collapse the whole batch into one step
    assert BS % batch_block == 0
    num_blocks = BS // batch_block

    # Flatten (batch, seq) in the wrapper (not in-kernel) so the projections
    # see a tall M axis and the kernel avoids in-kernel major relayouts.
    x2d = x.reshape(BS * N, q_dim)
    emb2d = embedding.reshape(BS * e_N, k_dim)

    # Pre-cast weights to the MXU compute dtype; fuse K and V weights.
    wq = params["wq"].astype(compute_dtype)
    wkv = jnp.concatenate([params["wk"], params["wv"]], axis=-1).astype(compute_dtype)
    wp = params["wp"].astype(compute_dtype)
    bp = params["bp"].astype(jnp.float32)

    kernel = functools.partial(
        _cross_attention_kernel,
        batch=batch_block, n_q=N, n_kv=e_N, n_heads=n_heads,
        head_dim=head_dim, qk_scale=scale, compute_dtype=compute_dtype)

    out2d = pl.pallas_call(
        kernel,
        out_shape=jax.ShapeDtypeStruct((BS * N, q_dim), x.dtype),
        grid_spec=pl.GridSpec(
            grid=(num_blocks,),
            in_specs=[
                pl.BlockSpec((batch_block * N, q_dim), lambda b: (b, 0)),
                pl.BlockSpec((batch_block * e_N, k_dim), lambda b: (b, 0)),
                pl.BlockSpec((q_dim, q_dim), lambda b: (0, 0)),
                pl.BlockSpec((k_dim, 2 * q_dim), lambda b: (0, 0)),
                pl.BlockSpec((q_dim, q_dim), lambda b: (0, 0)),
                pl.BlockSpec((1, q_dim), lambda b: (0, 0)),
            ],
            out_specs=pl.BlockSpec((batch_block * N, q_dim), lambda b: (b, 0)),
        ),
        compiler_params=pltpu.CompilerParams(
            dimension_semantics=("parallel",)),
    )(x2d, emb2d, wq, wkv, wp, bp)

    return out2d.reshape(BS, N, q_dim)


def cross_attention_reference(x, embedding, params, *, n_heads, qk_scale=None):
    """Pure-JAX reference mirroring the PyTorch forward (eval mode)."""
    BS, N, q_dim = x.shape
    _, e_N, _ = embedding.shape
    head_dim = q_dim // n_heads
    scale = qk_scale if qk_scale is not None else head_dim ** (-0.5)

    q = x @ params["wq"]
    k = embedding @ params["wk"]
    v = embedding @ params["wv"]

    q = q.reshape(BS, N, n_heads, head_dim).transpose(0, 2, 1, 3)
    k = k.reshape(BS, e_N, n_heads, head_dim).transpose(0, 2, 1, 3)
    v = v.reshape(BS, e_N, n_heads, head_dim).transpose(0, 2, 1, 3)

    attn = (q @ jnp.swapaxes(k, -2, -1)) * scale
    attn = jax.nn.softmax(attn, axis=-1)
    out = attn @ v
    out = out.transpose(0, 2, 1, 3).reshape(BS, N, q_dim)
    out = out @ params["wp"] + params["bp"][0]
    return x + out


def make_params(key, q_dim, k_dim):
    """Deterministic synthetic parameters (weights stored as (in, out))."""
    k1, k2, k3, k4, k5 = jax.random.split(key, 5)
    s = 0.05
    return {
        "wq": s * jax.random.normal(k1, (q_dim, q_dim), jnp.float32),
        "wk": s * jax.random.normal(k2, (k_dim, q_dim), jnp.float32),
        "wv": s * jax.random.normal(k3, (k_dim, q_dim), jnp.float32),
        "wp": s * jax.random.normal(k4, (q_dim, q_dim), jnp.float32),
        "bp": s * jax.random.normal(k5, (1, q_dim), jnp.float32),
    }


if __name__ == "__main__":
    BS, N, q_dim = 2, 8, 32       # x: (BS, N, q_dim)
    e_N, k_dim = 8, 16            # embedding: (BS, e_N, k_dim)
    n_heads = 4

    key = jax.random.PRNGKey(0)
    kx, ke, kp = jax.random.split(key, 3)
    x = jax.random.normal(kx, (BS, N, q_dim), jnp.float32)
    embedding = jax.random.normal(ke, (BS, e_N, k_dim), jnp.float32)
    params = make_params(kp, q_dim, k_dim)

    ref = cross_attention_reference(x, embedding, params, n_heads=n_heads)

    # f32 operand path (exact MXU inputs; approx reciprocal only deviation).
    out = cross_attention(x, embedding, params, n_heads=n_heads)
    out = jax.block_until_ready(out)
    assert out.shape == (BS, N, q_dim)
    assert jnp.allclose(out, ref, atol=5e-3, rtol=5e-3), "f32 path mismatch vs reference"

    # bf16 operand path (v6e/v7x recommendation) — looser tolerance.
    out_bf16 = cross_attention(x, embedding, params, n_heads=n_heads,
                               compute_dtype=jnp.bfloat16)
    out_bf16 = jax.block_until_ready(out_bf16)
    assert jnp.allclose(out_bf16, ref, atol=6e-2, rtol=6e-2), "bf16 path mismatch vs reference"

    print("KERNEL_OK")
</pallas_src>

<mosaic_0001>
module attributes {stable_mosaic.version = 11 : i64} {
  func.func @_cross_attention_kernel(%arg0: i32, %arg1: memref<16x32xf32, #tpu.memory_space<vmem>>, %arg2: memref<16x16xf32, #tpu.memory_space<vmem>>, %arg3: memref<32x32xf32, #tpu.memory_space<vmem>>, %arg4: memref<16x64xf32, #tpu.memory_space<vmem>>, %arg5: memref<32x32xf32, #tpu.memory_space<vmem>>, %arg6: memref<1x32xf32, #tpu.memory_space<vmem>>, %arg7: memref<16x32xf32, #tpu.memory_space<vmem>>) attributes {dimension_semantics = [#tpu.dimension_semantics<parallel>], iteration_bounds = array<i64: 1>, scalar_prefetch = 0 : i64, scratch_operands = 0 : i64, tpu.core_type = #tpu.core_type<tc>, window_params = [{transform_indices = @transform_0, window_bounds = array<i64: 16, 32>}, {transform_indices = @transform_1, window_bounds = array<i64: 16, 16>}, {pipeline_mode = #tpu.pipeline_mode<synchronous>, transform_indices = @transform_2, window_bounds = array<i64: 32, 32>}, {pipeline_mode = #tpu.pipeline_mode<synchronous>, transform_indices = @transform_3, window_bounds = array<i64: 16, 64>}, {pipeline_mode = #tpu.pipeline_mode<synchronous>, transform_indices = @transform_4, window_bounds = array<i64: 32, 32>}, {pipeline_mode = #tpu.pipeline_mode<synchronous>, transform_indices = @transform_5, window_bounds = array<i64: 1, 32>}, {transform_indices = @transform_6, window_bounds = array<i64: 16, 32>}]} {
    %c0 = arith.constant 0 : index
    %c0_0 = arith.constant 0 : index
    %0 = vector.load %arg1[%c0, %c0_0] : memref<16x32xf32, #tpu.memory_space<vmem>>, vector<16x32xf32>
    %c0_1 = arith.constant 0 : index
    %c0_2 = arith.constant 0 : index
    %1 = vector.load %arg2[%c0_1, %c0_2] : memref<16x16xf32, #tpu.memory_space<vmem>>, vector<16x16xf32>
    %c0_3 = arith.constant 0 : index
    %c0_4 = arith.constant 0 : index
    %2 = vector.load %arg3[%c0_3, %c0_4] : memref<32x32xf32, #tpu.memory_space<vmem>>, vector<32x32xf32>
    %cst = arith.constant dense<0.000000e+00> : vector<16x32xf32>
    %3 = tpu.matmul %0, %2, %cst {dimension_numbers = #tpu.dot_dimension_numbers<[1], [0], [0], [1], [0, 0, 1, 1], [], []>} : vector<16x32xf32>, vector<32x32xf32>, vector<16x32xf32> -> vector<16x32xf32>
    %cst_5 = arith.constant 0.353553385 : f32
    %4 = vector.broadcast %cst_5 : f32 to vector<16x32xf32>
    %5 = arith.mulf %3, %4 : vector<16x32xf32>
    %c0_6 = arith.constant 0 : index
    %c0_7 = arith.constant 0 : index
    %6 = vector.load %arg4[%c0_6, %c0_7] : memref<16x64xf32, #tpu.memory_space<vmem>>, vector<16x64xf32>
    %cst_8 = arith.constant dense<0.000000e+00> : vector<16x64xf32>
    %7 = tpu.matmul %1, %6, %cst_8 {dimension_numbers = #tpu.dot_dimension_numbers<[1], [0], [0], [1], [0, 0, 1, 1], [], []>} : vector<16x16xf32>, vector<16x64xf32>, vector<16x64xf32> -> vector<16x64xf32>
    %8 = vector.extract_strided_slice %7 {offsets = [0, 0], sizes = [16, 32], strides = [1, 1]} : vector<16x64xf32> to vector<16x32xf32>
    %9 = vector.extract_strided_slice %7 {offsets = [0, 32], sizes = [16, 32], strides = [1, 1]} : vector<16x64xf32> to vector<16x32xf32>
    %c0_9 = arith.constant 0 : index
    %c0_10 = arith.constant 0 : index
    %10 = vector.load %arg5[%c0_9, %c0_10] : memref<32x32xf32, #tpu.memory_space<vmem>>, vector<32x32xf32>
    %c0_11 = arith.constant 0 : index
    %c0_12 = arith.constant 0 : index
    %11 = vector.load %arg6[%c0_11, %c0_12] : memref<1x32xf32, #tpu.memory_space<vmem>>, vector<1x32xf32>
    %12 = vector.broadcast %11 : vector<1x32xf32> to vector<16x32xf32>
    %13 = arith.addf %0, %12 : vector<16x32xf32>
    %14 = vector.extract_strided_slice %5 {offsets = [0, 0], sizes = [16, 8], strides = [1, 1]} : vector<16x32xf32> to vector<16x8xf32>
    %15 = vector.shape_cast %14 : vector<16x8xf32> to vector<2x8x8xf32>
    %16 = vector.extract_strided_slice %8 {offsets = [0, 0], sizes = [16, 8], strides = [1, 1]} : vector<16x32xf32> to vector<16x8xf32>
    %17 = vector.shape_cast %16 : vector<16x8xf32> to vector<2x8x8xf32>
    %18 = vector.extract_strided_slice %9 {offsets = [0, 0], sizes = [16, 8], strides = [1, 1]} : vector<16x32xf32> to vector<16x8xf32>
    %19 = vector.shape_cast %18 : vector<16x8xf32> to vector<2x8x8xf32>
    %cst_13 = arith.constant dense<0.000000e+00> : vector<2x8x8xf32>
    %20 = tpu.matmul %15, %17, %cst_13 {dimension_numbers = #tpu.dot_dimension_numbers<[2], [2], [1], [1], [0, 0, 0, 1, 1, 1], [0], [0]>} : vector<2x8x8xf32>, vector<2x8x8xf32>, vector<2x8x8xf32> -> vector<2x8x8xf32>
    %cst_14 = arith.constant dense<0xFF800000> : vector<2x8xf32>
    %21 = vector.multi_reduction <maximumf>, %20, %cst_14 [2] : vector<2x8x8xf32> to vector<2x8xf32>
    %22 = vector.shape_cast %21 : vector<2x8xf32> to vector<2x8x1xf32>
    %23 = vector.broadcast %22 : vector<2x8x1xf32> to vector<2x8x8xf32>
    %24 = arith.subf %20, %23 : vector<2x8x8xf32>
    %25 = math.exp %24 : vector<2x8x8xf32>
    %cst_15 = arith.constant dense<0.000000e+00> : vector<2x8xf32>
    %26 = vector.multi_reduction <add>, %25, %cst_15 [2] : vector<2x8x8xf32> to vector<2x8xf32>
    %27 = vector.shape_cast %26 : vector<2x8xf32> to vector<2x8x1xf32>
    %28 = tpu.reciprocal %27 {approx = true} : vector<2x8x1xf32> -> vector<2x8x1xf32>
    %29 = vector.broadcast %28 : vector<2x8x1xf32> to vector<2x8x8xf32>
    %30 = arith.mulf %25, %29 : vector<2x8x8xf32>
    %cst_16 = arith.constant dense<0.000000e+00> : vector<2x8x8xf32>
    %31 = tpu.matmul %30, %19, %cst_16 {dimension_numbers = #tpu.dot_dimension_numbers<[2], [1], [1], [2], [0, 0, 0, 1, 1, 2], [0], [0]>} : vector<2x8x8xf32>, vector<2x8x8xf32>, vector<2x8x8xf32> -> vector<2x8x8xf32>
    %32 = vector.shape_cast %31 : vector<2x8x8xf32> to vector<16x8xf32>
    %33 = vector.extract_strided_slice %10 {offsets = [0, 0], sizes = [8, 32], strides = [1, 1]} : vector<32x32xf32> to vector<8x32xf32>
    %cst_17 = arith.constant dense<0.000000e+00> : vector<16x32xf32>
    %34 = tpu.matmul %32, %33, %cst_17 {dimension_numbers = #tpu.dot_dimension_numbers<[1], [0], [0], [1], [0, 0, 1, 1], [], []>} : vector<16x8xf32>, vector<8x32xf32>, vector<16x32xf32> -> vector<16x32xf32>
    %35 = arith.addf %13, %34 : vector<16x32xf32>
    %36 = vector.extract_strided_slice %5 {offsets = [0, 8], sizes = [16, 8], strides = [1, 1]} : vector<16x32xf32> to vector<16x8xf32>
    %37 = vector.shape_cast %36 : vector<16x8xf32> to vector<2x8x8xf32>
    %38 = vector.extract_strided_slice %8 {offsets = [0, 8], sizes = [16, 8], strides = [1, 1]} : vector<16x32xf32> to vector<16x8xf32>
    %39 = vector.shape_cast %38 : vector<16x8xf32> to vector<2x8x8xf32>
    %40 = vector.extract_strided_slice %9 {offsets = [0, 8], sizes = [16, 8], strides = [1, 1]} : vector<16x32xf32> to vector<16x8xf32>
    %41 = vector.shape_cast %40 : vector<16x8xf32> to vector<2x8x8xf32>
    %cst_18 = arith.constant dense<0.000000e+00> : vector<2x8x8xf32>
    %42 = tpu.matmul %37, %39, %cst_18 {dimension_numbers = #tpu.dot_dimension_numbers<[2], [2], [1], [1], [0, 0, 0, 1, 1, 1], [0], [0]>} : vector<2x8x8xf32>, vector<2x8x8xf32>, vector<2x8x8xf32> -> vector<2x8x8xf32>
    %cst_19 = arith.constant dense<0xFF800000> : vector<2x8xf32>
    %43 = vector.multi_reduction <maximumf>, %42, %cst_19 [2] : vector<2x8x8xf32> to vector<2x8xf32>
    %44 = vector.shape_cast %43 : vector<2x8xf32> to vector<2x8x1xf32>
    %45 = vector.broadcast %44 : vector<2x8x1xf32> to vector<2x8x8xf32>
    %46 = arith.subf %42, %45 : vector<2x8x8xf32>
    %47 = math.exp %46 : vector<2x8x8xf32>
    %cst_20 = arith.constant dense<0.000000e+00> : vector<2x8xf32>
    %48 = vector.multi_reduction <add>, %47, %cst_20 [2] : vector<2x8x8xf32> to vector<2x8xf32>
    %49 = vector.shape_cast %48 : vector<2x8xf32> to vector<2x8x1xf32>
    %50 = tpu.reciprocal %49 {approx = true} : vector<2x8x1xf32> -> vector<2x8x1xf32>
    %51 = vector.broadcast %50 : vector<2x8x1xf32> to vector<2x8x8xf32>
    %52 = arith.mulf %47, %51 : vector<2x8x8xf32>
    %cst_21 = arith.constant dense<0.000000e+00> : vector<2x8x8xf32>
    %53 = tpu.matmul %52, %41, %cst_21 {dimension_numbers = #tpu.dot_dimension_numbers<[2], [1], [1], [2], [0, 0, 0, 1, 1, 2], [0], [0]>} : vector<2x8x8xf32>, vector<2x8x8xf32>, vector<2x8x8xf32> -> vector<2x8x8xf32>
    %54 = vector.shape_cast %53 : vector<2x8x8xf32> to vector<16x8xf32>
    %55 = vector.extract_strided_slice %10 {offsets = [8, 0], sizes = [8, 32], strides = [1, 1]} : vector<32x32xf32> to vector<8x32xf32>
    %cst_22 = arith.constant dense<0.000000e+00> : vector<16x32xf32>
    %56 = tpu.matmul %54, %55, %cst_22 {dimension_numbers = #tpu.dot_dimension_numbers<[1], [0], [0], [1], [0, 0, 1, 1], [], []>} : vector<16x8xf32>, vector<8x32xf32>, vector<16x32xf32> -> vector<16x32xf32>
    %57 = arith.addf %35, %56 : vector<16x32xf32>
    %58 = vector.extract_strided_slice %5 {offsets = [0, 16], sizes = [16, 8], strides = [1, 1]} : vector<16x32xf32> to vector<16x8xf32>
    %59 = vector.shape_cast %58 : vector<16x8xf32> to vector<2x8x8xf32>
    %60 = vector.extract_strided_slice %8 {offsets = [0, 16], sizes = [16, 8], strides = [1, 1]} : vector<16x32xf32> to vector<16x8xf32>
    %61 = vector.shape_cast %60 : vector<16x8xf32> to vector<2x8x8xf32>
    %62 = vector.extract_strided_slice %9 {offsets = [0, 16], sizes = [16, 8], strides = [1, 1]} : vector<16x32xf32> to vector<16x8xf32>
    %63 = vector.shape_cast %62 : vector<16x8xf32> to vector<2x8x8xf32>
    %cst_23 = arith.constant dense<0.000000e+00> : vector<2x8x8xf32>
    %64 = tpu.matmul %59, %61, %cst_23 {dimension_numbers = #tpu.dot_dimension_numbers<[2], [2], [1], [1], [0, 0, 0, 1, 1, 1], [0], [0]>} : vector<2x8x8xf32>, vector<2x8x8xf32>, vector<2x8x8xf32> -> vector<2x8x8xf32>
    %cst_24 = arith.constant dense<0xFF800000> : vector<2x8xf32>
    %65 = vector.multi_reduction <maximumf>, %64, %cst_24 [2] : vector<2x8x8xf32> to vector<2x8xf32>
    %66 = vector.shape_cast %65 : vector<2x8xf32> to vector<2x8x1xf32>
    %67 = vector.broadcast %66 : vector<2x8x1xf32> to vector<2x8x8xf32>
    %68 = arith.subf %64, %67 : vector<2x8x8xf32>
    %69 = math.exp %68 : vector<2x8x8xf32>
    %cst_25 = arith.constant dense<0.000000e+00> : vector<2x8xf32>
    %70 = vector.multi_reduction <add>, %69, %cst_25 [2] : vector<2x8x8xf32> to vector<2x8xf32>
    %71 = vector.shape_cast %70 : vector<2x8xf32> to vector<2x8x1xf32>
    %72 = tpu.reciprocal %71 {approx = true} : vector<2x8x1xf32> -> vector<2x8x1xf32>
    %73 = vector.broadcast %72 : vector<2x8x1xf32> to vector<2x8x8xf32>
    %74 = arith.mulf %69, %73 : vector<2x8x8xf32>
    %cst_26 = arith.constant dense<0.000000e+00> : vector<2x8x8xf32>
    %75 = tpu.matmul %74, %63, %cst_26 {dimension_numbers = #tpu.dot_dimension_numbers<[2], [1], [1], [2], [0, 0, 0, 1, 1, 2], [0], [0]>} : vector<2x8x8xf32>, vector<2x8x8xf32>, vector<2x8x8xf32> -> vector<2x8x8xf32>
    %76 = vector.shape_cast %75 : vector<2x8x8xf32> to vector<16x8xf32>
    %77 = vector.extract_strided_slice %10 {offsets = [16, 0], sizes = [8, 32], strides = [1, 1]} : vector<32x32xf32> to vector<8x32xf32>
    %cst_27 = arith.constant dense<0.000000e+00> : vector<16x32xf32>
    %78 = tpu.matmul %76, %77, %cst_27 {dimension_numbers = #tpu.dot_dimension_numbers<[1], [0], [0], [1], [0, 0, 1, 1], [], []>} : vector<16x8xf32>, vector<8x32xf32>, vector<16x32xf32> -> vector<16x32xf32>
    %79 = arith.addf %57, %78 : vector<16x32xf32>
    %80 = vector.extract_strided_slice %5 {offsets = [0, 24], sizes = [16, 8], strides = [1, 1]} : vector<16x32xf32> to vector<16x8xf32>
    %81 = vector.shape_cast %80 : vector<16x8xf32> to vector<2x8x8xf32>
    %82 = vector.extract_strided_slice %8 {offsets = [0, 24], sizes = [16, 8], strides = [1, 1]} : vector<16x32xf32> to vector<16x8xf32>
    %83 = vector.shape_cast %82 : vector<16x8xf32> to vector<2x8x8xf32>
    %84 = vector.extract_strided_slice %9 {offsets = [0, 24], sizes = [16, 8], strides = [1, 1]} : vector<16x32xf32> to vector<16x8xf32>
    %85 = vector.shape_cast %84 : vector<16x8xf32> to vector<2x8x8xf32>
    %cst_28 = arith.constant dense<0.000000e+00> : vector<2x8x8xf32>
    %86 = tpu.matmul %81, %83, %cst_28 {dimension_numbers = #tpu.dot_dimension_numbers<[2], [2], [1], [1], [0, 0, 0, 1, 1, 1], [0], [0]>} : vector<2x8x8xf32>, vector<2x8x8xf32>, vector<2x8x8xf32> -> vector<2x8x8xf32>
    %cst_29 = arith.constant dense<0xFF800000> : vector<2x8xf32>
    %87 = vector.multi_reduction <maximumf>, %86, %cst_29 [2] : vector<2x8x8xf32> to vector<2x8xf32>
    %88 = vector.shape_cast %87 : vector<2x8xf32> to vector<2x8x1xf32>
    %89 = vector.broadcast %88 : vector<2x8x1xf32> to vector<2x8x8xf32>
    %90 = arith.subf %86, %89 : vector<2x8x8xf32>
    %91 = math.exp %90 : vector<2x8x8xf32>
    %cst_30 = arith.constant dense<0.000000e+00> : vector<2x8xf32>
    %92 = vector.multi_reduction <add>, %91, %cst_30 [2] : vector<2x8x8xf32> to vector<2x8xf32>
    %93 = vector.shape_cast %92 : vector<2x8xf32> to vector<2x8x1xf32>
    %94 = tpu.reciprocal %93 {approx = true} : vector<2x8x1xf32> -> vector<2x8x1xf32>
    %95 = vector.broadcast %94 : vector<2x8x1xf32> to vector<2x8x8xf32>
    %96 = arith.mulf %91, %95 : vector<2x8x8xf32>
    %cst_31 = arith.constant dense<0.000000e+00> : vector<2x8x8xf32>
    %97 = tpu.matmul %96, %85, %cst_31 {dimension_numbers = #tpu.dot_dimension_numbers<[2], [1], [1], [2], [0, 0, 0, 1, 1, 2], [0], [0]>} : vector<2x8x8xf32>, vector<2x8x8xf32>, vector<2x8x8xf32> -> vector<2x8x8xf32>
    %98 = vector.shape_cast %97 : vector<2x8x8xf32> to vector<16x8xf32>
    %99 = vector.extract_strided_slice %10 {offsets = [24, 0], sizes = [8, 32], strides = [1, 1]} : vector<32x32xf32> to vector<8x32xf32>
    %cst_32 = arith.constant dense<0.000000e+00> : vector<16x32xf32>
    %100 = tpu.matmul %98, %99, %cst_32 {dimension_numbers = #tpu.dot_dimension_numbers<[1], [0], [0], [1], [0, 0, 1, 1], [], []>} : vector<16x8xf32>, vector<8x32xf32>, vector<16x32xf32> -> vector<16x32xf32>
    %101 = arith.addf %79, %100 : vector<16x32xf32>
    %c0_33 = arith.constant 0 : index
    %c0_34 = arith.constant 0 : index
    %102 = vector.load %arg7[%c0_33, %c0_34] : memref<16x32xf32, #tpu.memory_space<vmem>>, vector<16x32xf32>
    tpu.vector_store %arg7[%c0_33, %c0_34], %101 {strides = array<i32>} : memref<16x32xf32, #tpu.memory_space<vmem>>, vector<16x32xf32>,
    return
  }
  func.func @transform_0(%arg0: i32) -> (i32, i32) {
    %c0_i32 = arith.constant 0 : i32
    %c0_i32_0 = arith.constant 0 : i32
    return %arg0, %c0_i32 : i32, i32
  }
  func.func @transform_1(%arg0: i32) -> (i32, i32) {
    %c0_i32 = arith.constant 0 : i32
    %c0_i32_0 = arith.constant 0 : i32
    return %arg0, %c0_i32 : i32, i32
  }
  func.func @transform_2(%arg0: i32) -> (i32, i32) {
    %c0_i32 = arith.constant 0 : i32
    %c0_i32_0 = arith.constant 0 : i32
    %c0_i32_1 = arith.constant 0 : i32
    return %c0_i32, %c0_i32_0 : i32, i32
  }
  func.func @transform_3(%arg0: i32) -> (i32, i32) {
    %c0_i32 = arith.constant 0 : i32
    %c0_i32_0 = arith.constant 0 : i32
    %c0_i32_1 = arith.constant 0 : i32
    return %c0_i32, %c0_i32_0 : i32, i32
  }
  func.func @transform_4(%arg0: i32) -> (i32, i32) {
    %c0_i32 = arith.constant 0 : i32
    %c0_i32_0 = arith.constant 0 : i32
    %c0_i32_1 = arith.constant 0 : i32
    return %c0_i32, %c0_i32_0 : i32, i32
  }
  func.func @transform_5(%arg0: i32) -> (i32, i32) {
    %c0_i32 = arith.constant 0 : i32
    %c0_i32_0 = arith.constant 0 : i32
    %c0_i32_1 = arith.constant 0 : i32
    return %c0_i32, %c0_i32_0 : i32, i32
  }
  func.func @transform_6(%arg0: i32) -> (i32, i32) {
    %c0_i32 = arith.constant 0 : i32
    %c0_i32_0 = arith.constant 0 : i32
    return %arg0, %c0_i32 : i32, i32
  }
}

</mosaic_0001>

<llo_original>
// kernel: tpu_custom_call.1
$region0: #{tpu_custom_call.1}
  #allocation0 [shape = 'u32[]', space=smem, size = 0x4, offset = 0x4, fixed_abs, tag = 'smem constant byte address 0x4 - core index']
  #allocation1 [shape = 'u32[144,128]{1,0:T(1,128)}', space=vmem, size = 0x12000, scoped, tag = 'internal scratch']
  %s0 = inlined_call_operand.hbm [shape: f32[16,32], index: 0, kind: input, shape index: {}]
  %s1 = inlined_call_operand.hbm [shape: f32[16,16], index: 1, kind: input, shape index: {}]
  %s2 = inlined_call_operand.hbm [shape: f32[32,32], index: 2, kind: input, shape index: {}]
  %s3 = inlined_call_operand.hbm [shape: f32[16,64], index: 3, kind: input, shape index: {}]
  %s4 = inlined_call_operand.hbm [shape: f32[32,32], index: 4, kind: input, shape index: {}]
  %s5 = inlined_call_operand.vmem [shape: f32[1,32], index: 5, kind: input, shape index: {}]
  %s6 = inlined_call_operand.hbm [shape: f32[16,32], index: 6, kind: output, shape index: {}]
  %s7 = sld [smem:[#allocation0]]
  $region54: #{tpu_custom_call.1} parent=0
    _
  %s9 = ssub.s32 1, %s7
  %s10 = scalar_select 0, %s9, %s7
  $region1: #{tpu_custom_call.1} parent=0
    #allocation2 [shape = 'u8[8192]{0}', space=vmem, size = 0x2000, scoped, tag = 'input window, operand 0, single buffered']
    #allocation3 [shape = 's32[1]{0}', space=sflag, size = 0x4, scoped, tag = 'scoped memory for tpu_custom_call.1']
    #allocation4 [shape = 's32[1]{0}', space=sflag, size = 0x4, scoped, tag = 'scoped memory for tpu_custom_call.1']
    #allocation5 [shape = 'u8[8192]{0}', space=vmem, size = 0x2000, scoped, tag = 'input window, operand 1, single buffered']
    #allocation6 [shape = 's32[1]{0}', space=sflag, size = 0x4, scoped, tag = 'scoped memory for tpu_custom_call.1']
    #allocation7 [shape = 'u8[16384]{0}', space=vmem, size = 0x4000, scoped, tag = 'input window, operand 2, single buffered']
    #allocation8 [shape = 'u8[8192]{0}', space=vmem, size = 0x2000, scoped, tag = 'input window, operand 3, single buffered']
    #allocation9 [shape = 's32[1]{0}', space=sflag, size = 0x4, scoped, tag = 'scoped memory for tpu_custom_call.1']
    #allocation10 [shape = 'u8[16384]{0}', space=vmem, size = 0x4000, scoped, tag = 'input window, operand 4, single buffered']
    #allocation11 [shape = 'u8[8192]{0}', space=vmem, size = 0x2000, scoped, tag = 'output window, operand 0, single buffered']
    %11 = vsyncpa [#allocation3], 0
    %12 = vsyncpa [#allocation6], 0
    %13 = vsyncpa [#allocation9], 0
    %14 = vsyncpa [#allocation4], 0
    // Predicated region
    $region2: #{tpu_custom_call.1} parent=1 // pred_check
      _
    $region3: #{tpu_custom_call.1} parent=1 // pred_check_branch
      %16 = sbr.rel (0) target = $region5
    $region4: #{tpu_custom_call.1} parent=1 // pred_region
      %s18 = ssub.s32 256, 256
      %19 = vsyncadd [#allocation3], %s18
      %s20 = sshll.u32 [#allocation2], 4
      %s21 = int_to_ptr.vmem [resolvable:$true] %s20
      %26 = dma.hbm_to_vmem [thread:$0]  %s0, 256, %s21, [#allocation3], 128, 128, 8
    $region5: #{tpu_custom_call.1} parent=1 // pred_fallthru
      _
    // Predicated region
    $region6: #{tpu_custom_call.1} parent=1 // pred_check
      _
    $region7: #{tpu_custom_call.1} parent=1 // pred_check_branch
      %28 = sbr.rel (0) target = $region9
    $region8: #{tpu_custom_call.1} parent=1 // pred_region
      %s30 = ssub.s32 256, 256
      %31 = vsyncadd [#allocation6], %s30
      %s32 = sshll.u32 [#allocation5], 4
      %s33 = int_to_ptr.vmem [resolvable:$true] %s32
      %38 = dma.hbm_to_vmem [thread:$0]  %s1, 256, %s33, [#allocation6], 128, 128, 8
    $region9: #{tpu_custom_call.1} parent=1 // pred_fallthru
      _
    // Predicated region
    $region10: #{tpu_custom_call.1} parent=1 // pred_check
      _
    $region11: #{tpu_custom_call.1} parent=1 // pred_check_branch
      %40 = sbr.rel (0) target = $region13
    $region12: #{tpu_custom_call.1} parent=1 // pred_region
      %s42 = ssub.s32 512, 512
      %43 = vsyncadd [#allocation6], %s42
      %s44 = sshll.u32 [#allocation7], 4
      %s45 = int_to_ptr.vmem [resolvable:$true] %s44
      %50 = dma.hbm_to_vmem [thread:$0]  %s2, 512, %s45, [#allocation6], 128, 128, 8
    $region13: #{tpu_custom_call.1} parent=1 // pred_fallthru
      _
    // Predicated region
    $region14: #{tpu_custom_call.1} parent=1 // pred_check
      _
    $region15: #{tpu_custom_call.1} parent=1 // pred_check_branch
      %52 = sbr.rel (0) target = $region17
    $region16: #{tpu_custom_call.1} parent=1 // pred_region
      %s54 = ssub.s32 256, 256
      %55 = vsyncadd [#allocation9], %s54
      %s56 = sshll.u32 [#allocation8], 4
      %s57 = int_to_ptr.vmem [resolvable:$true] %s56
      %62 = dma.hbm_to_vmem [thread:$0]  %s3, 256, %s57, [#allocation9], 128, 128, 8
    $region17: #{tpu_custom_call.1} parent=1 // pred_fallthru
      _
    // Predicated region
    $region18: #{tpu_custom_call.1} parent=1 // pred_check
      _
    $region19: #{tpu_custom_call.1} parent=1 // pred_check_branch
      %64 = sbr.rel (0) target = $region21
    $region20: #{tpu_custom_call.1} parent=1 // pred_region
      %s66 = ssub.s32 512, 512
      %67 = vsyncadd [#allocation9], %s66
      %s68 = sshll.u32 [#allocation10], 4
      %s69 = int_to_ptr.vmem [resolvable:$true] %s68
      %74 = dma.hbm_to_vmem [thread:$0]  %s4, 512, %s69, [#allocation9], 128, 128, 8
    $region21: #{tpu_custom_call.1} parent=1 // pred_fallthru
      _
    // Predicated region
    $region22: #{tpu_custom_call.1} parent=1 // pred_check
      _
    $region23: #{tpu_custom_call.1} parent=1 // pred_check_branch
      %76 = sbr.rel (0) target = $region25
    $region24: #{tpu_custom_call.1} parent=1 // pred_region
      _
    $region25: #{tpu_custom_call.1} parent=1 // pred_fallthru
      _
    // Predicated region
    $region26: #{tpu_custom_call.1} parent=1 // pred_check
      _
    $region27: #{tpu_custom_call.1} parent=1 // pred_check_branch
      %78 = sbr.rel (0) target = $region29
    $region28: #{tpu_custom_call.1} parent=1 // pred_region
      %79 = dma.done [#allocation3], 256
    $region29: #{tpu_custom_call.1} parent=1 // pred_fallthru
      _
    // Predicated region
    $region30: #{tpu_custom_call.1} parent=1 // pred_check
      _
    $region31: #{tpu_custom_call.1} parent=1 // pred_check_branch
      %81 = sbr.rel (0) target = $region33
    $region32: #{tpu_custom_call.1} parent=1 // pred_region
      %82 = dma.done [#allocation6], 256
    $region33: #{tpu_custom_call.1} parent=1 // pred_fallthru
      _
    // Predicated region
    $region34: #{tpu_custom_call.1} parent=1 // pred_check
      _
    $region35: #{tpu_custom_call.1} parent=1 // pred_check_branch
      %84 = sbr.rel (0) target = $region37
    $region36: #{tpu_custom_call.1} parent=1 // pred_region
      %85 = dma.done [#allocation6], 512
    $region37: #{tpu_custom_call.1} parent=1 // pred_fallthru
      _
    // Predicated region
    $region38: #{tpu_custom_call.1} parent=1 // pred_check
      _
    $region39: #{tpu_custom_call.1} parent=1 // pred_check_branch
      %87 = sbr.rel (0) target = $region41
    $region40: #{tpu_custom_call.1} parent=1 // pred_region
      %88 = dma.done [#allocation9], 256
    $region41: #{tpu_custom_call.1} parent=1 // pred_fallthru
      _
    // Predicated region
    $region42: #{tpu_custom_call.1} parent=1 // pred_check
      _
    $region43: #{tpu_custom_call.1} parent=1 // pred_check_branch
      %90 = sbr.rel (0) target = $region45
    $region44: #{tpu_custom_call.1} parent=1 // pred_region
      %91 = dma.done [#allocation9], 512
    $region45: #{tpu_custom_call.1} parent=1 // pred_fallthru
      _
    %v92 = vld [vmem:[#allocation2] sm:$0xff]
    %v93 = vld [vmem:[#allocation2 + $0x8] sm:$0xff]
    %v94 = vld [vmem:[#allocation5] sm:$0xff]
    %v95 = vld [vmem:[#allocation5 + $0x8] sm:$0xff]
    %v96 = vld [vmem:[#allocation7] sm:$0xff]
    %v97 = vld [vmem:[#allocation7 + $0x8] sm:$0xff]
    %v98 = vld [vmem:[#allocation7 + $0x10] sm:$0xff]
    %v99 = vld [vmem:[#allocation7 + $0x18] sm:$0xff]
    %vm100 = vcmask 261120
    %v102 = vsel %vm100, %v92, 0
    %v105 = vsel %vm100, %v93, 0
    %107 = vmatprep.subr.mxu0 0.0
    %108 = vmatpush1.msra.mxu0 %v96
    %109 = vmatprep.subr.mxu0 0.0
    %110 = vmatpush1.msra.mxu0 %v97
    %111 = vmatprep.subr.mxu0 0.0
    %112 = vmatpush1.msra.mxu0 %v98
    %113 = vmatprep.subr.mxu0 0.0
    %114 = vmatpush1.msra.mxu0 %v99
    %115 = vmatprep.subr.mxu0 0.0
    %116 = vmatpush1.msra.mxu0 0.0
    %117 = vmatprep.subr.mxu0 0.0
    %118 = vmatpush1.msra.mxu0 0.0
    %119 = vmatprep.subr.mxu0 0.0
    %120 = vmatpush1.msra.mxu0 0.0
    %121 = vmatprep.subr.mxu0 0.0
    %122 = vmatpush1.msra.mxu0 0.0
    %123 = vmatprep.subr.mxu0 0.0
    %124 = vmatpush1.msra.mxu0 0.0
    %125 = vmatprep.subr.mxu0 0.0
    %126 = vmatpush1.msra.mxu0 0.0
    %127 = vmatprep.subr.mxu0 0.0
    %128 = vmatpush1.msra.mxu0 0.0
    %129 = vmatprep.subr.mxu0 0.0
    %130 = vmatpush1.msra.mxu0 0.0
    %131 = vmatprep.subr.mxu0 0.0
    %132 = vmatpush1.msra.mxu0 0.0
    %133 = vmatprep.subr.mxu0 0.0
    %134 = vmatpush1.msra.mxu0 0.0
    %135 = vmatprep.subr.mxu0 0.0
    %136 = vmatpush1.msra.mxu0 0.0
    %137 = vmatprep.subr.mxu0 0.0
    %138 = vmatpush1.msra.mxu0 0.0
    %139 = vmatprep.subr.mxu0 0.0
    %140 = vmatpush1.msra.mxu0 0.0
    %141 = vmatprep.subr.mxu0 0.0
    %142 = vmatpush1.msra.mxu0 0.0
    %143 = vmatprep.subr.mxu0 0.0
    %144 = vmatpush1.msra.mxu0 0.0
    %145 = vmatprep.subr.mxu0 0.0
    %146 = vmatpush1.msra.mxu0 0.0
    %147 = vmatprep.subr.mxu0 0.0
    %148 = vmatpush1.msra.mxu0 0.0
    %149 = vmatprep.subr.mxu0 0.0
    %150 = vmatpush1.msra.mxu0 0.0
    %151 = vmatprep.subr.mxu0 0.0
    %152 = vmatpush1.msra.mxu0 0.0
    %153 = vmatprep.subr.mxu0 0.0
    %154 = vmatpush1.msra.mxu0 0.0
    %155 = vmatprep.subr.mxu0 0.0
    %156 = vmatpush1.msra.mxu0 0.0
    %157 = vmatprep.subr.mxu0 0.0
    %158 = vmatpush1.msra.mxu0 0.0
    %159 = vmatprep.subr.mxu0 0.0
    %160 = vmatpush1.msra.mxu0 0.0
    %161 = vmatprep.subr.mxu0 0.0
    %162 = vmatpush1.msra.mxu0 0.0
    %163 = vmatprep.subr.mxu0 0.0
    %164 = vmatpush1.msra.mxu0 0.0
    %165 = vmatprep.subr.mxu0 0.0
    %166 = vmatpush1.msra.mxu0 0.0
    %167 = vmatprep.subr.mxu0 0.0
    %168 = vmatpush1.msra.mxu0 0.0
    %169 = vmatprep.subr.mxu0 0.0
    %170 = vmatpush1.msra.mxu0 0.0
    %171 = vmatprep.mubr.f32.mxu0 0.0
    %172 = vmatmul.mubr.f32.gmra.mrb[0].mxu0 %v102
    %v173 = vpop.f32.mrb[0].mxu0
    %v174 = vadd.f32 0.0, %v173
    %v175 = vpop.f32.mrb[0].mxu0
    %176 = vmatprep.mubr.f32.mxu0 0.0
    %177 = vmatmul.mubr.f32.gmra.mrb[0].mxu0 %v105
    %v178 = vpop.f32.mrb[0].mxu0
    %v179 = vadd.f32 0.0, %v178
    %v180 = vpop.f32.mrb[0].mxu0
    %181 = vdwg.mxu0
    %v182 = vmul.f32 %v174, 0.35355338
    %v183 = vmul.f32 %v179, 0.35355338
    %v184 = vld [vmem:[#allocation8] sm:$0xff]
    %v185 = vld [vmem:[#allocation8 + $0x8] sm:$0xff]
    %vm186 = vcmask 130048
    %v188 = vsel %vm186, %v94, 0
    %v191 = vsel %vm186, %v95, 0
    %193 = vmatprep.subr.mxu0 0.0
    %194 = vmatpush1.msra.mxu0 %v184
    %195 = vmatprep.subr.mxu0 0.0
    %196 = vmatpush1.msra.mxu0 %v185
    %197 = vmatprep.subr.mxu0 0.0
    %198 = vmatpush1.msra.mxu0 0.0
    %199 = vmatprep.subr.mxu0 0.0
    %200 = vmatpush1.msra.mxu0 0.0
    %201 = vmatprep.subr.mxu0 0.0
    %202 = vmatpush1.msra.mxu0 0.0
    %203 = vmatprep.subr.mxu0 0.0
    %204 = vmatpush1.msra.mxu0 0.0
    %205 = vmatprep.subr.mxu0 0.0
    %206 = vmatpush1.msra.mxu0 0.0
    %207 = vmatprep.subr.mxu0 0.0
    %208 = vmatpush1.msra.mxu0 0.0
    %209 = vmatprep.subr.mxu0 0.0
    %210 = vmatpush1.msra.mxu0 0.0
    %211 = vmatprep.subr.mxu0 0.0
    %212 = vmatpush1.msra.mxu0 0.0
    %213 = vmatprep.subr.mxu0 0.0
    %214 = vmatpush1.msra.mxu0 0.0
    %215 = vmatprep.subr.mxu0 0.0
    %216 = vmatpush1.msra.mxu0 0.0
    %217 = vmatprep.subr.mxu0 0.0
    %218 = vmatpush1.msra.mxu0 0.0
    %219 = vmatprep.subr.mxu0 0.0
    %220 = vmatpush1.msra.mxu0 0.0
    %221 = vmatprep.subr.mxu0 0.0
    %222 = vmatpush1.msra.mxu0 0.0
    %223 = vmatprep.subr.mxu0 0.0
    %224 = vmatpush1.msra.mxu0 0.0
    %225 = vmatprep.subr.mxu0 0.0
    %226 = vmatpush1.msra.mxu0 0.0
    %227 = vmatprep.subr.mxu0 0.0
    %228 = vmatpush1.msra.mxu0 0.0
    %229 = vmatprep.subr.mxu0 0.0
    %230 = vmatpush1.msra.mxu0 0.0
    %231 = vmatprep.subr.mxu0 0.0
    %232 = vmatpush1.msra.mxu0 0.0
    %233 = vmatprep.subr.mxu0 0.0
    %234 = vmatpush1.msra.mxu0 0.0
    %235 = vmatprep.subr.mxu0 0.0
    %236 = vmatpush1.msra.mxu0 0.0
    %237 = vmatprep.subr.mxu0 0.0
    %238 = vmatpush1.msra.mxu0 0.0
    %239 = vmatprep.subr.mxu0 0.0
    %240 = vmatpush1.msra.mxu0 0.0
    %241 = vmatprep.subr.mxu0 0.0
    %242 = vmatpush1.msra.mxu0 0.0
    %243 = vmatprep.subr.mxu0 0.0
    %244 = vmatpush1.msra.mxu0 0.0
    %245 = vmatprep.subr.mxu0 0.0
    %246 = vmatpush1.msra.mxu0 0.0
    %247 = vmatprep.subr.mxu0 0.0
    %248 = vmatpush1.msra.mxu0 0.0
    %249 = vmatprep.subr.mxu0 0.0
    %250 = vmatpush1.msra.mxu0 0.0
    %251 = vmatprep.subr.mxu0 0.0
    %252 = vmatpush1.msra.mxu0 0.0
    %253 = vmatprep.subr.mxu0 0.0
    %254 = vmatpush1.msra.mxu0 0.0
    %255 = vmatprep.subr.mxu0 0.0
    %256 = vmatpush1.msra.mxu0 0.0
    %257 = vmatprep.mubr.f32.mxu0 0.0
    %258 = vmatmul.mubr.f32.gmra.mrb[0].mxu0 %v188
    %v259 = vpop.f32.mrb[0].mxu0
    %v260 = vadd.f32 0.0, %v259
    %v261 = vpop.f32.mrb[0].mxu0
    %262 = vmatprep.mubr.f32.mxu0 0.0
    %263 = vmatmul.mubr.f32.gmra.mrb[0].mxu0 %v191
    %v264 = vpop.f32.mrb[0].mxu0
    %v265 = vadd.f32 0.0, %v264
    %v266 = vpop.f32.mrb[0].mxu0
    %267 = vdwg.mxu0
    %v268 = vld [vmem:[#allocation10] sm:$0xff]
    %v269 = vld [vmem:[#allocation10 + $0x8] sm:$0xff]
    %v270 = vld [vmem:[#allocation10 + $0x10] sm:$0xff]
    %v271 = vld [vmem:[#allocation10 + $0x18] sm:$0xff]
    %v272 = vld [vmem:[%s5] sm:$0x1]
    %v274 = vlaneseq
    %v275 = vshrl.u32 %v274, 7
    %v276 = vsub.s32 0, %v275
    %v277 = vrot.slane %v272, %v276
    %v279 = vadd.f32 %v92, %v277
    %v280 = vadd.f32 %v93, %v277
    %vm281 = vcmask 64512
    %v283 = vsel %vm281, %v182, 0
    %v286 = vsel %vm281, %v260, 0
    %288 = vmatprep.subr.mxu0 0.0
    %289 = vmatpush1.xpose.msra.mxu0 %v286
    %290 = vmatprep.subr.mxu0 0.0
    %291 = vmatpush1.xpose.msra.mxu0 0.0
    %292 = vmatprep.subr.mxu0 0.0
    %293 = vmatpush1.xpose.msra.mxu0 0.0
    %294 = vmatprep.subr.mxu0 0.0
    %295 = vmatpush1.xpose.msra.mxu0 0.0
    %296 = vmatprep.subr.mxu0 0.0
    %297 = vmatpush1.xpose.msra.mxu0 0.0
    %298 = vmatprep.subr.mxu0 0.0
    %299 = vmatpush1.xpose.msra.mxu0 0.0
    %300 = vmatprep.subr.mxu0 0.0
    %301 = vmatpush1.xpose.msra.mxu0 0.0
    %302 = vmatprep.subr.mxu0 0.0
    %303 = vmatpush1.xpose.msra.mxu0 0.0
    %304 = vmatprep.subr.mxu0 0.0
    %305 = vmatpush1.xpose.msra.mxu0 0.0
    %306 = vmatprep.subr.mxu0 0.0
    %307 = vmatpush1.xpose.msra.mxu0 0.0
    %308 = vmatprep.subr.mxu0 0.0
    %309 = vmatpush1.xpose.msra.mxu0 0.0
    %310 = vmatprep.subr.mxu0 0.0
    %311 = vmatpush1.xpose.msra.mxu0 0.0
    %312 = vmatprep.subr.mxu0 0.0
    %313 = vmatpush1.xpose.msra.mxu0 0.0
    %314 = vmatprep.subr.mxu0 0.0
    %315 = vmatpush1.xpose.msra.mxu0 0.0
    %316 = vmatprep.subr.mxu0 0.0
    %317 = vmatpush1.xpose.msra.mxu0 0.0
    %318 = vmatprep.subr.mxu0 0.0
    %319 = vmatpush1.xpose.msra.mxu0 0.0
    %320 = vmatprep.subr.mxu0 0.0
    %321 = vmatpush1.xpose.msra.mxu0 0.0
    %322 = vmatprep.subr.mxu0 0.0
    %323 = vmatpush1.xpose.msra.mxu0 0.0
    %324 = vmatprep.subr.mxu0 0.0
    %325 = vmatpush1.xpose.msra.mxu0 0.0
    %326 = vmatprep.subr.mxu0 0.0
    %327 = vmatpush1.xpose.msra.mxu0 0.0
    %328 = vmatprep.subr.mxu0 0.0
    %329 = vmatpush1.xpose.msra.mxu0 0.0
    %330 = vmatprep.subr.mxu0 0.0
    %331 = vmatpush1.xpose.msra.mxu0 0.0
    %332 = vmatprep.subr.mxu0 0.0
    %333 = vmatpush1.xpose.msra.mxu0 0.0
    %334 = vmatprep.subr.mxu0 0.0
    %335 = vmatpush1.xpose.msra.mxu0 0.0
    %336 = vmatprep.subr.mxu0 0.0
    %337 = vmatpush1.xpose.msra.mxu0 0.0
    %338 = vmatprep.subr.mxu0 0.0
    %339 = vmatpush1.xpose.msra.mxu0 0.0
    %340 = vmatprep.subr.mxu0 0.0
    %341 = vmatpush1.xpose.msra.mxu0 0.0
    %342 = vmatprep.subr.mxu0 0.0
    %343 = vmatpush1.xpose.msra.mxu0 0.0
    %344 = vmatprep.subr.mxu0 0.0
    %345 = vmatpush1.xpose.msra.mxu0 0.0
    %346 = vmatprep.subr.mxu0 0.0
    %347 = vmatpush1.xpose.msra.mxu0 0.0
    %348 = vmatprep.subr.mxu0 0.0
    %349 = vmatpush1.xpose.msra.mxu0 0.0
    %350 = vmatprep.subr.mxu0 0.0
    %351 = vmatpush1.xpose.msra.mxu0 0.0
    %352 = vmatprep.mubr.f32.mxu0 0.0
    %353 = vmatmul.mubr.f32.gmra.mrb[0].mxu0 %v283
    %v354 = vpop.f32.mrb[0].mxu0
    %v355 = vadd.f32 0.0, %v354
    %v356 = vpop.f32.mrb[0].mxu0
    %357 = vdwg.mxu0
    %v359 = vsel %vm281, %v183, 0
    %v362 = vsel %vm281, %v265, 0
    %364 = vmatprep.subr.mxu0 0.0
    %365 = vmatpush1.xpose.msra.mxu0 %v362
    %366 = vmatprep.subr.mxu0 0.0
    %367 = vmatpush1.xpose.msra.mxu0 0.0
    %368 = vmatprep.subr.mxu0 0.0
    %369 = vmatpush1.xpose.msra.mxu0 0.0
    %370 = vmatprep.subr.mxu0 0.0
    %371 = vmatpush1.xpose.msra.mxu0 0.0
    %372 = vmatprep.subr.mxu0 0.0
    %373 = vmatpush1.xpose.msra.mxu0 0.0
    %374 = vmatprep.subr.mxu0 0.0
    %375 = vmatpush1.xpose.msra.mxu0 0.0
    %376 = vmatprep.subr.mxu0 0.0
    %377 = vmatpush1.xpose.msra.mxu0 0.0
    %378 = vmatprep.subr.mxu0 0.0
    %379 = vmatpush1.xpose.msra.mxu0 0.0
    %380 = vmatprep.subr.mxu0 0.0
    %381 = vmatpush1.xpose.msra.mxu0 0.0
    %382 = vmatprep.subr.mxu0 0.0
    %383 = vmatpush1.xpose.msra.mxu0 0.0
    %384 = vmatprep.subr.mxu0 0.0
    %385 = vmatpush1.xpose.msra.mxu0 0.0
    %386 = vmatprep.subr.mxu0 0.0
    %387 = vmatpush1.xpose.msra.mxu0 0.0
    %388 = vmatprep.subr.mxu0 0.0
    %389 = vmatpush1.xpose.msra.mxu0 0.0
    %390 = vmatprep.subr.mxu0 0.0
    %391 = vmatpush1.xpose.msra.mxu0 0.0
    %392 = vmatprep.subr.mxu0 0.0
    %393 = vmatpush1.xpose.msra.mxu0 0.0
    %394 = vmatprep.subr.mxu0 0.0
    %395 = vmatpush1.xpose.msra.mxu0 0.0
    %396 = vmatprep.subr.mxu0 0.0
    %397 = vmatpush1.xpose.msra.mxu0 0.0
    %398 = vmatprep.subr.mxu0 0.0
    %399 = vmatpush1.xpose.msra.mxu0 0.0
    %400 = vmatprep.subr.mxu0 0.0
    %401 = vmatpush1.xpose.msra.mxu0 0.0
    %402 = vmatprep.subr.mxu0 0.0
    %403 = vmatpush1.xpose.msra.mxu0 0.0
    %404 = vmatprep.subr.mxu0 0.0
    %405 = vmatpush1.xpose.msra.mxu0 0.0
    %406 = vmatprep.subr.mxu0 0.0
    %407 = vmatpush1.xpose.msra.mxu0 0.0
    %408 = vmatprep.subr.mxu0 0.0
    %409 = vmatpush1.xpose.msra.mxu0 0.0
    %410 = vmatprep.subr.mxu0 0.0
    %411 = vmatpush1.xpose.msra.mxu0 0.0
    %412 = vmatprep.subr.mxu0 0.0
    %413 = vmatpush1.xpose.msra.mxu0 0.0
    %414 = vmatprep.subr.mxu0 0.0
    %415 = vmatpush1.xpose.msra.mxu0 0.0
    %416 = vmatprep.subr.mxu0 0.0
    %417 = vmatpush1.xpose.msra.mxu0 0.0
    %418 = vmatprep.subr.mxu0 0.0
    %419 = vmatpush1.xpose.msra.mxu0 0.0
    %420 = vmatprep.subr.mxu0 0.0
    %421 = vmatpush1.xpose.msra.mxu0 0.0
    %422 = vmatprep.subr.mxu0 0.0
    %423 = vmatpush1.xpose.msra.mxu0 0.0
    %424 = vmatprep.subr.mxu0 0.0
    %425 = vmatpush1.xpose.msra.mxu0 0.0
    %426 = vmatprep.subr.mxu0 0.0
    %427 = vmatpush1.xpose.msra.mxu0 0.0
    %428 = vmatprep.mubr.f32.mxu0 0.0
    %429 = vmatmul.mubr.f32.gmra.mrb[0].mxu0 %v359
    %v430 = vpop.f32.mrb[0].mxu0
    %v431 = vadd.f32 0.0, %v430
    %v432 = vpop.f32.mrb[0].mxu0
    %433 = vdwg.mxu0
    %v434 = vsel %vm281, %v355, -inf
    %435 = vmax.xlane.f32.xlu0 %v434
    %v436 = vpop.xlane.xlu0 %435
    %v437 = vsel %vm281, %v431, -inf
    %438 = vmax.xlane.f32.xlu0 %v437
    %v439 = vpop.xlane.xlu0 %438
    %v440 = vsub.f32 %v355, %v436
    %v441 = vsub.f32 %v431, %v439
    %v442 = vmul.f32 %v440, 1.442695
    %v443 = vpow.pop %v442
    %v444 = vmul.f32 %v441, 1.442695
    %v445 = vpow.pop %v444
    %v446 = vsel %vm281, %v443, 0.0
    %447 = vadd.xlane.f32.xlu0 %v446
    %v448 = vpop.xlane.xlu0 %447
    %v449 = vsel %vm281, %v445, 0.0
    %450 = vadd.xlane.f32.xlu0 %v449
    %v451 = vpop.xlane.xlu0 %450
    %v452 = vrcp.pop %v448
    %v453 = vrcp.pop %v451
    %v454 = vmul.f32 %v443, %v452
    %v455 = vmul.f32 %v445, %v453
    %456 = vrot.lane.b32.xlu0 %v260, 96
    %v457 = vpop.permute.xlu0 %456
    %v460 = vsel %vm281, %v454, 0
    %462 = vmatprep.subr.mxu0 0.0
    %463 = vmatpush1.msra.mxu0 %v457
    %464 = vmatprep.subr.mxu0 0.0
    %465 = vmatpush1.msra.mxu0 0.0
    %466 = vmatprep.subr.mxu0 0.0
    %467 = vmatpush1.msra.mxu0 0.0
    %468 = vmatprep.subr.mxu0 0.0
    %469 = vmatpush1.msra.mxu0 0.0
    %470 = vmatprep.subr.mxu0 0.0
    %471 = vmatpush1.msra.mxu0 0.0
    %472 = vmatprep.subr.mxu0 0.0
    %473 = vmatpush1.msra.mxu0 0.0
    %474 = vmatprep.subr.mxu0 0.0
    %475 = vmatpush1.msra.mxu0 0.0
    %476 = vmatprep.subr.mxu0 0.0
    %477 = vmatpush1.msra.mxu0 0.0
    %478 = vmatprep.subr.mxu0 0.0
    %479 = vmatpush1.msra.mxu0 0.0
    %480 = vmatprep.subr.mxu0 0.0
    %481 = vmatpush1.msra.mxu0 0.0
    %482 = vmatprep.subr.mxu0 0.0
    %483 = vmatpush1.msra.mxu0 0.0
    %484 = vmatprep.subr.mxu0 0.0
    %485 = vmatpush1.msra.mxu0 0.0
    %486 = vmatprep.subr.mxu0 0.0
    %487 = vmatpush1.msra.mxu0 0.0
    %488 = vmatprep.subr.mxu0 0.0
    %489 = vmatpush1.msra.mxu0 0.0
    %490 = vmatprep.subr.mxu0 0.0
    %491 = vmatpush1.msra.mxu0 0.0
    %492 = vmatprep.subr.mxu0 0.0
    %493 = vmatpush1.msra.mxu0 0.0
    %494 = vmatprep.subr.mxu0 0.0
    %495 = vmatpush1.msra.mxu0 0.0
    %496 = vmatprep.subr.mxu0 0.0
    %497 = vmatpush1.msra.mxu0 0.0
    %498 = vmatprep.subr.mxu0 0.0
    %499 = vmatpush1.msra.mxu0 0.0
    %500 = vmatprep.subr.mxu0 0.0
    %501 = vmatpush1.msra.mxu0 0.0
    %502 = vmatprep.subr.mxu0 0.0
    %503 = vmatpush1.msra.mxu0 0.0
    %504 = vmatprep.subr.mxu0 0.0
    %505 = vmatpush1.msra.mxu0 0.0
    %506 = vmatprep.subr.mxu0 0.0
    %507 = vmatpush1.msra.mxu0 0.0
    %508 = vmatprep.subr.mxu0 0.0
    %509 = vmatpush1.msra.mxu0 0.0
    %510 = vmatprep.subr.mxu0 0.0
    %511 = vmatpush1.msra.mxu0 0.0
    %512 = vmatprep.subr.mxu0 0.0
    %513 = vmatpush1.msra.mxu0 0.0
    %514 = vmatprep.subr.mxu0 0.0
    %515 = vmatpush1.msra.mxu0 0.0
    %516 = vmatprep.subr.mxu0 0.0
    %517 = vmatpush1.msra.mxu0 0.0
    %518 = vmatprep.subr.mxu0 0.0
    %519 = vmatpush1.msra.mxu0 0.0
    %520 = vmatprep.subr.mxu0 0.0
    %521 = vmatpush1.msra.mxu0 0.0
    %522 = vmatprep.subr.mxu0 0.0
    %523 = vmatpush1.msra.mxu0 0.0
    %524 = vmatprep.subr.mxu0 0.0
    %525 = vmatpush1.msra.mxu0 0.0
    %526 = vmatprep.mubr.f32.mxu0 0.0
    %527 = vmatmul.mubr.f32.gmra.mrb[0].mxu0 %v460
    %v528 = vpop.f32.mrb[0].mxu0
    %v529 = vadd.f32 0.0, %v528
    %v530 = vpop.f32.mrb[0].mxu0
    %531 = vdwg.mxu0
    %532 = vrot.lane.b32.xlu0 %v265, 96
    %v533 = vpop.permute.xlu0 %532
    %v536 = vsel %vm281, %v455, 0
    %538 = vmatprep.subr.mxu0 0.0
    %539 = vmatpush1.msra.mxu0 %v533
    %540 = vmatprep.subr.mxu0 0.0
    %541 = vmatpush1.msra.mxu0 0.0
    %542 = vmatprep.subr.mxu0 0.0
    %543 = vmatpush1.msra.mxu0 0.0
    %544 = vmatprep.subr.mxu0 0.0
    %545 = vmatpush1.msra.mxu0 0.0
    %546 = vmatprep.subr.mxu0 0.0
    %547 = vmatpush1.msra.mxu0 0.0
    %548 = vmatprep.subr.mxu0 0.0
    %549 = vmatpush1.msra.mxu0 0.0
    %550 = vmatprep.subr.mxu0 0.0
    %551 = vmatpush1.msra.mxu0 0.0
    %552 = vmatprep.subr.mxu0 0.0
    %553 = vmatpush1.msra.mxu0 0.0
    %554 = vmatprep.subr.mxu0 0.0
    %555 = vmatpush1.msra.mxu0 0.0
    %556 = vmatprep.subr.mxu0 0.0
    %557 = vmatpush1.msra.mxu0 0.0
    %558 = vmatprep.subr.mxu0 0.0
    %559 = vmatpush1.msra.mxu0 0.0
    %560 = vmatprep.subr.mxu0 0.0
    %561 = vmatpush1.msra.mxu0 0.0
    %562 = vmatprep.subr.mxu0 0.0
    %563 = vmatpush1.msra.mxu0 0.0
    %564 = vmatprep.subr.mxu0 0.0
    %565 = vmatpush1.msra.mxu0 0.0
    %566 = vmatprep.subr.mxu0 0.0
    %567 = vmatpush1.msra.mxu0 0.0
    %568 = vmatprep.subr.mxu0 0.0
    %569 = vmatpush1.msra.mxu0 0.0
    %570 = vmatprep.subr.mxu0 0.0
    %571 = vmatpush1.msra.mxu0 0.0
    %572 = vmatprep.subr.mxu0 0.0
    %573 = vmatpush1.msra.mxu0 0.0
    %574 = vmatprep.subr.mxu0 0.0
    %575 = vmatpush1.msra.mxu0 0.0
    %576 = vmatprep.subr.mxu0 0.0
    %577 = vmatpush1.msra.mxu0 0.0
    %578 = vmatprep.subr.mxu0 0.0
    %579 = vmatpush1.msra.mxu0 0.0
    %580 = vmatprep.subr.mxu0 0.0
    %581 = vmatpush1.msra.mxu0 0.0
    %582 = vmatprep.subr.mxu0 0.0
    %583 = vmatpush1.msra.mxu0 0.0
    %584 = vmatprep.subr.mxu0 0.0
    %585 = vmatpush1.msra.mxu0 0.0
    %586 = vmatprep.subr.mxu0 0.0
    %587 = vmatpush1.msra.mxu0 0.0
    %588 = vmatprep.subr.mxu0 0.0
    %589 = vmatpush1.msra.mxu0 0.0
    %590 = vmatprep.subr.mxu0 0.0
    %591 = vmatpush1.msra.mxu0 0.0
    %592 = vmatprep.subr.mxu0 0.0
    %593 = vmatpush1.msra.mxu0 0.0
    %594 = vmatprep.subr.mxu0 0.0
    %595 = vmatpush1.msra.mxu0 0.0
    %596 = vmatprep.subr.mxu0 0.0
    %597 = vmatpush1.msra.mxu0 0.0
    %598 = vmatprep.subr.mxu0 0.0
    %599 = vmatpush1.msra.mxu0 0.0
    %600 = vmatprep.subr.mxu0 0.0
    %601 = vmatpush1.msra.mxu0 0.0
    %602 = vmatprep.mubr.f32.mxu0 0.0
    %603 = vmatmul.mubr.f32.gmra.mrb[0].mxu0 %v536
    %v604 = vpop.f32.mrb[0].mxu0
    %v605 = vadd.f32 0.0, %v604
    %v606 = vpop.f32.mrb[0].mxu0
    %607 = vdwg.mxu0
    %v609 = vsel %vm281, %v529, 0
    %v612 = vsel %vm281, %v605, 0
    %614 = vmatprep.subr.mxu0 0.0
    %615 = vmatpush1.msra.mxu0 %v268
    %616 = vmatprep.subr.mxu0 0.0
    %617 = vmatpush1.msra.mxu0 0.0
    %618 = vmatprep.subr.mxu0 0.0
    %619 = vmatpush1.msra.mxu0 0.0
    %620 = vmatprep.subr.mxu0 0.0
    %621 = vmatpush1.msra.mxu0 0.0
    %622 = vmatprep.subr.mxu0 0.0
    %623 = vmatpush1.msra.mxu0 0.0
    %624 = vmatprep.subr.mxu0 0.0
    %625 = vmatpush1.msra.mxu0 0.0
    %626 = vmatprep.subr.mxu0 0.0
    %627 = vmatpush1.msra.mxu0 0.0
    %628 = vmatprep.subr.mxu0 0.0
    %629 = vmatpush1.msra.mxu0 0.0
    %630 = vmatprep.subr.mxu0 0.0
    %631 = vmatpush1.msra.mxu0 0.0
    %632 = vmatprep.subr.mxu0 0.0
    %633 = vmatpush1.msra.mxu0 0.0
    %634 = vmatprep.subr.mxu0 0.0
    %635 = vmatpush1.msra.mxu0 0.0
    %636 = vmatprep.subr.mxu0 0.0
    %637 = vmatpush1.msra.mxu0 0.0
    %638 = vmatprep.subr.mxu0 0.0
    %639 = vmatpush1.msra.mxu0 0.0
    %640 = vmatprep.subr.mxu0 0.0
    %641 = vmatpush1.msra.mxu0 0.0
    %642 = vmatprep.subr.mxu0 0.0
    %643 = vmatpush1.msra.mxu0 0.0
    %644 = vmatprep.subr.mxu0 0.0
    %645 = vmatpush1.msra.mxu0 0.0
    %646 = vmatprep.subr.mxu0 0.0
    %647 = vmatpush1.msra.mxu0 0.0
    %648 = vmatprep.subr.mxu0 0.0
    %649 = vmatpush1.msra.mxu0 0.0
    %650 = vmatprep.subr.mxu0 0.0
    %651 = vmatpush1.msra.mxu0 0.0
    %652 = vmatprep.subr.mxu0 0.0
    %653 = vmatpush1.msra.mxu0 0.0
    %654 = vmatprep.subr.mxu0 0.0
    %655 = vmatpush1.msra.mxu0 0.0
    %656 = vmatprep.subr.mxu0 0.0
    %657 = vmatpush1.msra.mxu0 0.0
    %658 = vmatprep.subr.mxu0 0.0
    %659 = vmatpush1.msra.mxu0 0.0
    %660 = vmatprep.subr.mxu0 0.0
    %661 = vmatpush1.msra.mxu0 0.0
    %662 = vmatprep.subr.mxu0 0.0
    %663 = vmatpush1.msra.mxu0 0.0
    %664 = vmatprep.subr.mxu0 0.0
    %665 = vmatpush1.msra.mxu0 0.0
    %666 = vmatprep.subr.mxu0 0.0
    %667 = vmatpush1.msra.mxu0 0.0
    %668 = vmatprep.subr.mxu0 0.0
    %669 = vmatpush1.msra.mxu0 0.0
    %670 = vmatprep.subr.mxu0 0.0
    %671 = vmatpush1.msra.mxu0 0.0
    %672 = vmatprep.subr.mxu0 0.0
    %673 = vmatpush1.msra.mxu0 0.0
    %674 = vmatprep.subr.mxu0 0.0
    %675 = vmatpush1.msra.mxu0 0.0
    %676 = vmatprep.subr.mxu0 0.0
    %677 = vmatpush1.msra.mxu0 0.0
    %678 = vmatprep.mubr.f32.mxu0 0.0
    %679 = vmatmul.mubr.f32.gmra.mrb[0].mxu0 %v609
    %v680 = vpop.f32.mrb[0].mxu0
    %v681 = vadd.f32 0.0, %v680
    %v682 = vpop.f32.mrb[0].mxu0
    %683 = vmatprep.mubr.f32.mxu0 0.0
    %684 = vmatmul.mubr.f32.gmra.mrb[0].mxu0 %v612
    %v685 = vpop.f32.mrb[0].mxu0
    %v686 = vadd.f32 0.0, %v685
    %v687 = vpop.f32.mrb[0].mxu0
    %688 = vdwg.mxu0
    %v689 = vadd.f32 %v279, %v681
    %v690 = vadd.f32 %v280, %v686
    %691 = vrot.lane.b32.xlu0 %v182, 120
    %v692 = vpop.permute.xlu0 %691
    %693 = vrot.lane.b32.xlu0 %v260, 120
    %v694 = vpop.permute.xlu0 %693
    %v695 = vsel %vm281, %v692, 0
    %v697 = vsel %vm281, %v694, 0
    %699 = vmatprep.subr.mxu0 0.0
    %700 = vmatpush1.xpose.msra.mxu0 %v697
    %701 = vmatprep.subr.mxu0 0.0
    %702 = vmatpush1.xpose.msra.mxu0 0.0
    %703 = vmatprep.subr.mxu0 0.0
    %704 = vmatpush1.xpose.msra.mxu0 0.0
    %705 = vmatprep.subr.mxu0 0.0
    %706 = vmatpush1.xpose.msra.mxu0 0.0
    %707 = vmatprep.subr.mxu0 0.0
    %708 = vmatpush1.xpose.msra.mxu0 0.0
    %709 = vmatprep.subr.mxu0 0.0
    %710 = vmatpush1.xpose.msra.mxu0 0.0
    %711 = vmatprep.subr.mxu0 0.0
    %712 = vmatpush1.xpose.msra.mxu0 0.0
    %713 = vmatprep.subr.mxu0 0.0
    %714 = vmatpush1.xpose.msra.mxu0 0.0
    %715 = vmatprep.subr.mxu0 0.0
    %716 = vmatpush1.xpose.msra.mxu0 0.0
    %717 = vmatprep.subr.mxu0 0.0
    %718 = vmatpush1.xpose.msra.mxu0 0.0
    %719 = vmatprep.subr.mxu0 0.0
    %720 = vmatpush1.xpose.msra.mxu0 0.0
    %721 = vmatprep.subr.mxu0 0.0
    %722 = vmatpush1.xpose.msra.mxu0 0.0
    %723 = vmatprep.subr.mxu0 0.0
    %724 = vmatpush1.xpose.msra.mxu0 0.0
    %725 = vmatprep.subr.mxu0 0.0
    %726 = vmatpush1.xpose.msra.mxu0 0.0
    %727 = vmatprep.subr.mxu0 0.0
    %728 = vmatpush1.xpose.msra.mxu0 0.0
    %729 = vmatprep.subr.mxu0 0.0
    %730 = vmatpush1.xpose.msra.mxu0 0.0
    %731 = vmatprep.subr.mxu0 0.0
    %732 = vmatpush1.xpose.msra.mxu0 0.0
    %733 = vmatprep.subr.mxu0 0.0
    %734 = vmatpush1.xpose.msra.mxu0 0.0
    %735 = vmatprep.subr.mxu0 0.0
    %736 = vmatpush1.xpose.msra.mxu0 0.0
    %737 = vmatprep.subr.mxu0 0.0
    %738 = vmatpush1.xpose.msra.mxu0 0.0
    %739 = vmatprep.subr.mxu0 0.0
    %740 = vmatpush1.xpose.msra.mxu0 0.0
    %741 = vmatprep.subr.mxu0 0.0
    %742 = vmatpush1.xpose.msra.mxu0 0.0
    %743 = vmatprep.subr.mxu0 0.0
    %744 = vmatpush1.xpose.msra.mxu0 0.0
    %745 = vmatprep.subr.mxu0 0.0
    %746 = vmatpush1.xpose.msra.mxu0 0.0
    %747 = vmatprep.subr.mxu0 0.0
    %748 = vmatpush1.xpose.msra.mxu0 0.0
    %749 = vmatprep.subr.mxu0 0.0
    %750 = vmatpush1.xpose.msra.mxu0 0.0
    %751 = vmatprep.subr.mxu0 0.0
    %752 = vmatpush1.xpose.msra.mxu0 0.0
    %753 = vmatprep.subr.mxu0 0.0
    %754 = vmatpush1.xpose.msra.mxu0 0.0
    %755 = vmatprep.subr.mxu0 0.0
    %756 = vmatpush1.xpose.msra.mxu0 0.0
    %757 = vmatprep.subr.mxu0 0.0
    %758 = vmatpush1.xpose.msra.mxu0 0.0
    %759 = vmatprep.subr.mxu0 0.0
    %760 = vmatpush1.xpose.msra.mxu0 0.0
    %761 = vmatprep.subr.mxu0 0.0
    %762 = vmatpush1.xpose.msra.mxu0 0.0
    %763 = vmatprep.mubr.f32.mxu0 0.0
    %764 = vmatmul.mubr.f32.gmra.mrb[0].mxu0 %v695
    %v765 = vpop.f32.mrb[0].mxu0
    %v766 = vadd.f32 0.0, %v765
    %v767 = vpop.f32.mrb[0].mxu0
    %768 = vdwg.mxu0
    %769 = vrot.lane.b32.xlu0 %v183, 120
    %v770 = vpop.permute.xlu0 %769
    %771 = vrot.lane.b32.xlu0 %v265, 120
    %v772 = vpop.permute.xlu0 %771
    %v773 = vsel %vm281, %v770, 0
    %v775 = vsel %vm281, %v772, 0
    %777 = vmatprep.subr.mxu0 0.0
    %778 = vmatpush1.xpose.msra.mxu0 %v775
    %779 = vmatprep.subr.mxu0 0.0
    %780 = vmatpush1.xpose.msra.mxu0 0.0
    %781 = vmatprep.subr.mxu0 0.0
    %782 = vmatpush1.xpose.msra.mxu0 0.0
    %783 = vmatprep.subr.mxu0 0.0
    %784 = vmatpush1.xpose.msra.mxu0 0.0
    %785 = vmatprep.subr.mxu0 0.0
    %786 = vmatpush1.xpose.msra.mxu0 0.0
    %787 = vmatprep.subr.mxu0 0.0
    %788 = vmatpush1.xpose.msra.mxu0 0.0
    %789 = vmatprep.subr.mxu0 0.0
    %790 = vmatpush1.xpose.msra.mxu0 0.0
    %791 = vmatprep.subr.mxu0 0.0
    %792 = vmatpush1.xpose.msra.mxu0 0.0
    %793 = vmatprep.subr.mxu0 0.0
    %794 = vmatpush1.xpose.msra.mxu0 0.0
    %795 = vmatprep.subr.mxu0 0.0
    %796 = vmatpush1.xpose.msra.mxu0 0.0
    %797 = vmatprep.subr.mxu0 0.0
    %798 = vmatpush1.xpose.msra.mxu0 0.0
    %799 = vmatprep.subr.mxu0 0.0
    %800 = vmatpush1.xpose.msra.mxu0 0.0
    %801 = vmatprep.subr.mxu0 0.0
    %802 = vmatpush1.xpose.msra.mxu0 0.0
    %803 = vmatprep.subr.mxu0 0.0
    %804 = vmatpush1.xpose.msra.mxu0 0.0
    %805 = vmatprep.subr.mxu0 0.0
    %806 = vmatpush1.xpose.msra.mxu0 0.0
    %807 = vmatprep.subr.mxu0 0.0
    %808 = vmatpush1.xpose.msra.mxu0 0.0
    %809 = vmatprep.subr.mxu0 0.0
    %810 = vmatpush1.xpose.msra.mxu0 0.0
    %811 = vmatprep.subr.mxu0 0.0
    %812 = vmatpush1.xpose.msra.mxu0 0.0
    %813 = vmatprep.subr.mxu0 0.0
    %814 = vmatpush1.xpose.msra.mxu0 0.0
    %815 = vmatprep.subr.mxu0 0.0
    %816 = vmatpush1.xpose.msra.mxu0 0.0
    %817 = vmatprep.subr.mxu0 0.0
    %818 = vmatpush1.xpose.msra.mxu0 0.0
    %819 = vmatprep.subr.mxu0 0.0
    %820 = vmatpush1.xpose.msra.mxu0 0.0
    %821 = vmatprep.subr.mxu0 0.0
    %822 = vmatpush1.xpose.msra.mxu0 0.0
    %823 = vmatprep.subr.mxu0 0.0
    %824 = vmatpush1.xpose.msra.mxu0 0.0
    %825 = vmatprep.subr.mxu0 0.0
    %826 = vmatpush1.xpose.msra.mxu0 0.0
    %827 = vmatprep.subr.mxu0 0.0
    %828 = vmatpush1.xpose.msra.mxu0 0.0
    %829 = vmatprep.subr.mxu0 0.0
    %830 = vmatpush1.xpose.msra.mxu0 0.0
    %831 = vmatprep.subr.mxu0 0.0
    %832 = vmatpush1.xpose.msra.mxu0 0.0
    %833 = vmatprep.subr.mxu0 0.0
    %834 = vmatpush1.xpose.msra.mxu0 0.0
    %835 = vmatprep.subr.mxu0 0.0
    %836 = vmatpush1.xpose.msra.mxu0 0.0
    %837 = vmatprep.subr.mxu0 0.0
    %838 = vmatpush1.xpose.msra.mxu0 0.0
    %839 = vmatprep.subr.mxu0 0.0
    %840 = vmatpush1.xpose.msra.mxu0 0.0
    %841 = vmatprep.mubr.f32.mxu0 0.0
    %842 = vmatmul.mubr.f32.gmra.mrb[0].mxu0 %v773
    %v843 = vpop.f32.mrb[0].mxu0
    %v844 = vadd.f32 0.0, %v843
    %v845 = vpop.f32.mrb[0].mxu0
    %846 = vdwg.mxu0
    %v847 = vsel %vm281, %v766, -inf
    %848 = vmax.xlane.f32.xlu0 %v847
    %v849 = vpop.xlane.xlu0 %848
    %v850 = vsel %vm281, %v844, -inf
    %851 = vmax.xlane.f32.xlu0 %v850
    %v852 = vpop.xlane.xlu0 %851
    %v853 = vsub.f32 %v766, %v849
    %v854 = vsub.f32 %v844, %v852
    %v855 = vmul.f32 %v853, 1.442695
    %v856 = vpow.pop %v855
    %v857 = vmul.f32 %v854, 1.442695
    %v858 = vpow.pop %v857
    %v859 = vsel %vm281, %v856, 0.0
    %860 = vadd.xlane.f32.xlu0 %v859
    %v861 = vpop.xlane.xlu0 %860
    %v862 = vsel %vm281, %v858, 0.0
    %863 = vadd.xlane.f32.xlu0 %v862
    %v864 = vpop.xlane.xlu0 %863
    %v865 = vrcp.pop %v861
    %v866 = vrcp.pop %v864
    %v867 = vmul.f32 %v856, %v865
    %v868 = vmul.f32 %v858, %v866
    %869 = vrot.lane.b32.xlu0 %v260, 88
    %v870 = vpop.permute.xlu0 %869
    %v873 = vsel %vm281, %v867, 0
    %875 = vmatprep.subr.mxu0 0.0
    %876 = vmatpush1.msra.mxu0 %v870
    %877 = vmatprep.subr.mxu0 0.0
    %878 = vmatpush1.msra.mxu0 0.0
    %879 = vmatprep.subr.mxu0 0.0
    %880 = vmatpush1.msra.mxu0 0.0
    %881 = vmatprep.subr.mxu0 0.0
    %882 = vmatpush1.msra.mxu0 0.0
    %883 = vmatprep.subr.mxu0 0.0
    %884 = vmatpush1.msra.mxu0 0.0
    %885 = vmatprep.subr.mxu0 0.0
    %886 = vmatpush1.msra.mxu0 0.0
    %887 = vmatprep.subr.mxu0 0.0
    %888 = vmatpush1.msra.mxu0 0.0
    %889 = vmatprep.subr.mxu0 0.0
    %890 = vmatpush1.msra.mxu0 0.0
    %891 = vmatprep.subr.mxu0 0.0
    %892 = vmatpush1.msra.mxu0 0.0
    %893 = vmatprep.subr.mxu0 0.0
    %894 = vmatpush1.msra.mxu0 0.0
    %895 = vmatprep.subr.mxu0 0.0
    %896 = vmatpush1.msra.mxu0 0.0
    %897 = vmatprep.subr.mxu0 0.0
    %898 = vmatpush1.msra.mxu0 0.0
    %899 = vmatprep.subr.mxu0 0.0
    %900 = vmatpush1.msra.mxu0 0.0
    %901 = vmatprep.subr.mxu0 0.0
    %902 = vmatpush1.msra.mxu0 0.0
    %903 = vmatprep.subr.mxu0 0.0
    %904 = vmatpush1.msra.mxu0 0.0
    %905 = vmatprep.subr.mxu0 0.0
    %906 = vmatpush1.msra.mxu0 0.0
    %907 = vmatprep.subr.mxu0 0.0
    %908 = vmatpush1.msra.mxu0 0.0
    %909 = vmatprep.subr.mxu0 0.0
    %910 = vmatpush1.msra.mxu0 0.0
    %911 = vmatprep.subr.mxu0 0.0
    %912 = vmatpush1.msra.mxu0 0.0
    %913 = vmatprep.subr.mxu0 0.0
    %914 = vmatpush1.msra.mxu0 0.0
    %915 = vmatprep.subr.mxu0 0.0
    %916 = vmatpush1.msra.mxu0 0.0
    %917 = vmatprep.subr.mxu0 0.0
    %918 = vmatpush1.msra.mxu0 0.0
    %919 = vmatprep.subr.mxu0 0.0
    %920 = vmatpush1.msra.mxu0 0.0
    %921 = vmatprep.subr.mxu0 0.0
    %922 = vmatpush1.msra.mxu0 0.0
    %923 = vmatprep.subr.mxu0 0.0
    %924 = vmatpush1.msra.mxu0 0.0
    %925 = vmatprep.subr.mxu0 0.0
    %926 = vmatpush1.msra.mxu0 0.0
    %927 = vmatprep.subr.mxu0 0.0
    %928 = vmatpush1.msra.mxu0 0.0
    %929 = vmatprep.subr.mxu0 0.0
    %930 = vmatpush1.msra.mxu0 0.0
    %931 = vmatprep.subr.mxu0 0.0
    %932 = vmatpush1.msra.mxu0 0.0
    %933 = vmatprep.subr.mxu0 0.0
    %934 = vmatpush1.msra.mxu0 0.0
    %935 = vmatprep.subr.mxu0 0.0
    %936 = vmatpush1.msra.mxu0 0.0
    %937 = vmatprep.subr.mxu0 0.0
    %938 = vmatpush1.msra.mxu0 0.0
    %939 = vmatprep.mubr.f32.mxu0 0.0
    %940 = vmatmul.mubr.f32.gmra.mrb[0].mxu0 %v873
    %v941 = vpop.f32.mrb[0].mxu0
    %v942 = vadd.f32 0.0, %v941
    %v943 = vpop.f32.mrb[0].mxu0
    %944 = vdwg.mxu0
    %945 = vrot.lane.b32.xlu0 %v265, 88
    %v946 = vpop.permute.xlu0 %945
    %v949 = vsel %vm281, %v868, 0
    %951 = vmatprep.subr.mxu0 0.0
    %952 = vmatpush1.msra.mxu0 %v946
    %953 = vmatprep.subr.mxu0 0.0
    %954 = vmatpush1.msra.mxu0 0.0
    %955 = vmatprep.subr.mxu0 0.0
    %956 = vmatpush1.msra.mxu0 0.0
    %957 = vmatprep.subr.mxu0 0.0
    %958 = vmatpush1.msra.mxu0 0.0
    %959 = vmatprep.subr.mxu0 0.0
    %960 = vmatpush1.msra.mxu0 0.0
    %961 = vmatprep.subr.mxu0 0.0
    %962 = vmatpush1.msra.mxu0 0.0
    %963 = vmatprep.subr.mxu0 0.0
    %964 = vmatpush1.msra.mxu0 0.0
    %965 = vmatprep.subr.mxu0 0.0
    %966 = vmatpush1.msra.mxu0 0.0
    %967 = vmatprep.subr.mxu0 0.0
    %968 = vmatpush1.msra.mxu0 0.0
    %969 = vmatprep.subr.mxu0 0.0
    %970 = vmatpush1.msra.mxu0 0.0
    %971 = vmatprep.subr.mxu0 0.0
    %972 = vmatpush1.msra.mxu0 0.0
    %973 = vmatprep.subr.mxu0 0.0
    %974 = vmatpush1.msra.mxu0 0.0
    %975 = vmatprep.subr.mxu0 0.0
    %976 = vmatpush1.msra.mxu0 0.0
    %977 = vmatprep.subr.mxu0 0.0
    %978 = vmatpush1.msra.mxu0 0.0
    %979 = vmatprep.subr.mxu0 0.0
    %980 = vmatpush1.msra.mxu0 0.0
    %981 = vmatprep.subr.mxu0 0.0
    %982 = vmatpush1.msra.mxu0 0.0
    %983 = vmatprep.subr.mxu0 0.0
    %984 = vmatpush1.msra.mxu0 0.0
    %985 = vmatprep.subr.mxu0 0.0
    %986 = vmatpush1.msra.mxu0 0.0
    %987 = vmatprep.subr.mxu0 0.0
    %988 = vmatpush1.msra.mxu0 0.0
    %989 = vmatprep.subr.mxu0 0.0
    %990 = vmatpush1.msra.mxu0 0.0
    %991 = vmatprep.subr.mxu0 0.0
    %992 = vmatpush1.msra.mxu0 0.0
    %993 = vmatprep.subr.mxu0 0.0
    %994 = vmatpush1.msra.mxu0 0.0
    %995 = vmatprep.subr.mxu0 0.0
    %996 = vmatpush1.msra.mxu0 0.0
    %997 = vmatprep.subr.mxu0 0.0
    %998 = vmatpush1.msra.mxu0 0.0
    %999 = vmatprep.subr.mxu0 0.0
    %1000 = vmatpush1.msra.mxu0 0.0
    %1001 = vmatprep.subr.mxu0 0.0
    %1002 = vmatpush1.msra.mxu0 0.0
    %1003 = vmatprep.subr.mxu0 0.0
    %1004 = vmatpush1.msra.mxu0 0.0
    %1005 = vmatprep.subr.mxu0 0.0
    %1006 = vmatpush1.msra.mxu0 0.0
    %1007 = vmatprep.subr.mxu0 0.0
    %1008 = vmatpush1.msra.mxu0 0.0
    %1009 = vmatprep.subr.mxu0 0.0
    %1010 = vmatpush1.msra.mxu0 0.0
    %1011 = vmatprep.subr.mxu0 0.0
    %1012 = vmatpush1.msra.mxu0 0.0
    %1013 = vmatprep.subr.mxu0 0.0
    %1014 = vmatpush1.msra.mxu0 0.0
    %1015 = vmatprep.mubr.f32.mxu0 0.0
    %1016 = vmatmul.mubr.f32.gmra.mrb[0].mxu0 %v949
    %v1017 = vpop.f32.mrb[0].mxu0
    %v1018 = vadd.f32 0.0, %v1017
    %v1019 = vpop.f32.mrb[0].mxu0
    %1020 = vdwg.mxu0
    %v1022 = vsel %vm281, %v942, 0
    %v1025 = vsel %vm281, %v1018, 0
    %1027 = vmatprep.subr.mxu0 0.0
    %1028 = vmatpush1.msra.mxu0 %v269
    %1029 = vmatprep.subr.mxu0 0.0
    %1030 = vmatpush1.msra.mxu0 0.0
    %1031 = vmatprep.subr.mxu0 0.0
    %1032 = vmatpush1.msra.mxu0 0.0
    %1033 = vmatprep.subr.mxu0 0.0
    %1034 = vmatpush1.msra.mxu0 0.0
    %1035 = vmatprep.subr.mxu0 0.0
    %1036 = vmatpush1.msra.mxu0 0.0
    %1037 = vmatprep.subr.mxu0 0.0
    %1038 = vmatpush1.msra.mxu0 0.0
    %1039 = vmatprep.subr.mxu0 0.0
    %1040 = vmatpush1.msra.mxu0 0.0
    %1041 = vmatprep.subr.mxu0 0.0
    %1042 = vmatpush1.msra.mxu0 0.0
    %1043 = vmatprep.subr.mxu0 0.0
    %1044 = vmatpush1.msra.mxu0 0.0
    %1045 = vmatprep.subr.mxu0 0.0
    %1046 = vmatpush1.msra.mxu0 0.0
    %1047 = vmatprep.subr.mxu0 0.0
    %1048 = vmatpush1.msra.mxu0 0.0
    %1049 = vmatprep.subr.mxu0 0.0
    %1050 = vmatpush1.msra.mxu0 0.0
    %1051 = vmatprep.subr.mxu0 0.0
    %1052 = vmatpush1.msra.mxu0 0.0
    %1053 = vmatprep.subr.mxu0 0.0
    %1054 = vmatpush1.msra.mxu0 0.0
    %1055 = vmatprep.subr.mxu0 0.0
    %1056 = vmatpush1.msra.mxu0 0.0
    %1057 = vmatprep.subr.mxu0 0.0
    %1058 = vmatpush1.msra.mxu0 0.0
    %1059 = vmatprep.subr.mxu0 0.0
    %1060 = vmatpush1.msra.mxu0 0.0
    %1061 = vmatprep.subr.mxu0 0.0
    %1062 = vmatpush1.msra.mxu0 0.0
    %1063 = vmatprep.subr.mxu0 0.0
    %1064 = vmatpush1.msra.mxu0 0.0
    %1065 = vmatprep.subr.mxu0 0.0
    %1066 = vmatpush1.msra.mxu0 0.0
    %1067 = vmatprep.subr.mxu0 0.0
    %1068 = vmatpush1.msra.mxu0 0.0
    %1069 = vmatprep.subr.mxu0 0.0
    %1070 = vmatpush1.msra.mxu0 0.0
    %1071 = vmatprep.subr.mxu0 0.0
    %1072 = vmatpush1.msra.mxu0 0.0
    %1073 = vmatprep.subr.mxu0 0.0
    %1074 = vmatpush1.msra.mxu0 0.0
    %1075 = vmatprep.subr.mxu0 0.0
    %1076 = vmatpush1.msra.mxu0 0.0
    %1077 = vmatprep.subr.mxu0 0.0
    %1078 = vmatpush1.msra.mxu0 0.0
    %1079 = vmatprep.subr.mxu0 0.0
    %1080 = vmatpush1.msra.mxu0 0.0
    %1081 = vmatprep.subr.mxu0 0.0
    %1082 = vmatpush1.msra.mxu0 0.0
    %1083 = vmatprep.subr.mxu0 0.0
    %1084 = vmatpush1.msra.mxu0 0.0
    %1085 = vmatprep.subr.mxu0 0.0
    %1086 = vmatpush1.msra.mxu0 0.0
    %1087 = vmatprep.subr.mxu0 0.0
    %1088 = vmatpush1.msra.mxu0 0.0
    %1089 = vmatprep.subr.mxu0 0.0
    %1090 = vmatpush1.msra.mxu0 0.0
    %1091 = vmatprep.mubr.f32.mxu0 0.0
    %1092 = vmatmul.mubr.f32.gmra.mrb[0].mxu0 %v1022
    %v1093 = vpop.f32.mrb[0].mxu0
    %v1094 = vadd.f32 0.0, %v1093
    %v1095 = vpop.f32.mrb[0].mxu0
    %1096 = vmatprep.mubr.f32.mxu0 0.0
    %1097 = vmatmul.mubr.f32.gmra.mrb[0].mxu0 %v1025
    %v1098 = vpop.f32.mrb[0].mxu0
    %v1099 = vadd.f32 0.0, %v1098
    %v1100 = vpop.f32.mrb[0].mxu0
    %1101 = vdwg.mxu0
    %v1102 = vadd.f32 %v689, %v1094
    %v1103 = vadd.f32 %v690, %v1099
    %1104 = vrot.lane.b32.xlu0 %v182, 112
    %v1105 = vpop.permute.xlu0 %1104
    %1106 = vrot.lane.b32.xlu0 %v260, 112
    %v1107 = vpop.permute.xlu0 %1106
    %v1108 = vsel %vm281, %v1105, 0
    %v1110 = vsel %vm281, %v1107, 0
    %1112 = vmatprep.subr.mxu0 0.0
    %1113 = vmatpush1.xpose.msra.mxu0 %v1110
    %1114 = vmatprep.subr.mxu0 0.0
    %1115 = vmatpush1.xpose.msra.mxu0 0.0
    %1116 = vmatprep.subr.mxu0 0.0
    %1117 = vmatpush1.xpose.msra.mxu0 0.0
    %1118 = vmatprep.subr.mxu0 0.0
    %1119 = vmatpush1.xpose.msra.mxu0 0.0
    %1120 = vmatprep.subr.mxu0 0.0
    %1121 = vmatpush1.xpose.msra.mxu0 0.0
    %1122 = vmatprep.subr.mxu0 0.0
    %1123 = vmatpush1.xpose.msra.mxu0 0.0
    %1124 = vmatprep.subr.mxu0 0.0
    %1125 = vmatpush1.xpose.msra.mxu0 0.0
    %1126 = vmatprep.subr.mxu0 0.0
    %1127 = vmatpush1.xpose.msra.mxu0 0.0
    %1128 = vmatprep.subr.mxu0 0.0
    %1129 = vmatpush1.xpose.msra.mxu0 0.0
    %1130 = vmatprep.subr.mxu0 0.0
    %1131 = vmatpush1.xpose.msra.mxu0 0.0
    %1132 = vmatprep.subr.mxu0 0.0
    %1133 = vmatpush1.xpose.msra.mxu0 0.0
    %1134 = vmatprep.subr.mxu0 0.0
    %1135 = vmatpush1.xpose.msra.mxu0 0.0
    %1136 = vmatprep.subr.mxu0 0.0
    %1137 = vmatpush1.xpose.msra.mxu0 0.0
    %1138 = vmatprep.subr.mxu0 0.0
    %1139 = vmatpush1.xpose.msra.mxu0 0.0
    %1140 = vmatprep.subr.mxu0 0.0
    %1141 = vmatpush1.xpose.msra.mxu0 0.0
    %1142 = vmatprep.subr.mxu0 0.0
    %1143 = vmatpush1.xpose.msra.mxu0 0.0
    %1144 = vmatprep.subr.mxu0 0.0
    %1145 = vmatpush1.xpose.msra.mxu0 0.0
    %1146 = vmatprep.subr.mxu0 0.0
    %1147 = vmatpush1.xpose.msra.mxu0 0.0
    %1148 = vmatprep.subr.mxu0 0.0
    %1149 = vmatpush1.xpose.msra.mxu0 0.0
    %1150 = vmatprep.subr.mxu0 0.0
    %1151 = vmatpush1.xpose.msra.mxu0 0.0
    %1152 = vmatprep.subr.mxu0 0.0
    %1153 = vmatpush1.xpose.msra.mxu0 0.0
    %1154 = vmatprep.subr.mxu0 0.0
    %1155 = vmatpush1.xpose.msra.mxu0 0.0
    %1156 = vmatprep.subr.mxu0 0.0
    %1157 = vmatpush1.xpose.msra.mxu0 0.0
    %1158 = vmatprep.subr.mxu0 0.0
    %1159 = vmatpush1.xpose.msra.mxu0 0.0
    %1160 = vmatprep.subr.mxu0 0.0
    %1161 = vmatpush1.xpose.msra.mxu0 0.0
    %1162 = vmatprep.subr.mxu0 0.0
    %1163 = vmatpush1.xpose.msra.mxu0 0.0
    %1164 = vmatprep.subr.mxu0 0.0
    %1165 = vmatpush1.xpose.msra.mxu0 0.0
    %1166 = vmatprep.subr.mxu0 0.0
    %1167 = vmatpush1.xpose.msra.mxu0 0.0
    %1168 = vmatprep.subr.mxu0 0.0
    %1169 = vmatpush1.xpose.msra.mxu0 0.0
    %1170 = vmatprep.subr.mxu0 0.0
    %1171 = vmatpush1.xpose.msra.mxu0 0.0
    %1172 = vmatprep.subr.mxu0 0.0
    %1173 = vmatpush1.xpose.msra.mxu0 0.0
    %1174 = vmatprep.subr.mxu0 0.0
    %1175 = vmatpush1.xpose.msra.mxu0 0.0
    %1176 = vmatprep.mubr.f32.mxu0 0.0
    %1177 = vmatmul.mubr.f32.gmra.mrb[0].mxu0 %v1108
    %v1178 = vpop.f32.mrb[0].mxu0
    %v1179 = vadd.f32 0.0, %v1178
    %v1180 = vpop.f32.mrb[0].mxu0
    %1181 = vdwg.mxu0
    %1182 = vrot.lane.b32.xlu0 %v183, 112
    %v1183 = vpop.permute.xlu0 %1182
    %1184 = vrot.lane.b32.xlu0 %v265, 112
    %v1185 = vpop.permute.xlu0 %1184
    %v1186 = vsel %vm281, %v1183, 0
    %v1188 = vsel %vm281, %v1185, 0
    %1190 = vmatprep.subr.mxu0 0.0
    %1191 = vmatpush1.xpose.msra.mxu0 %v1188
    %1192 = vmatprep.subr.mxu0 0.0
    %1193 = vmatpush1.xpose.msra.mxu0 0.0
    %1194 = vmatprep.subr.mxu0 0.0
    %1195 = vmatpush1.xpose.msra.mxu0 0.0
    %1196 = vmatprep.subr.mxu0 0.0
    %1197 = vmatpush1.xpose.msra.mxu0 0.0
    %1198 = vmatprep.subr.mxu0 0.0
    %1199 = vmatpush1.xpose.msra.mxu0 0.0
    %1200 = vmatprep.subr.mxu0 0.0
    %1201 = vmatpush1.xpose.msra.mxu0 0.0
    %1202 = vmatprep.subr.mxu0 0.0
    %1203 = vmatpush1.xpose.msra.mxu0 0.0
    %1204 = vmatprep.subr.mxu0 0.0
    %1205 = vmatpush1.xpose.msra.mxu0 0.0
    %1206 = vmatprep.subr.mxu0 0.0
    %1207 = vmatpush1.xpose.msra.mxu0 0.0
    %1208 = vmatprep.subr.mxu0 0.0
    %1209 = vmatpush1.xpose.msra.mxu0 0.0
    %1210 = vmatprep.subr.mxu0 0.0
    %1211 = vmatpush1.xpose.msra.mxu0 0.0
    %1212 = vmatprep.subr.mxu0 0.0
    %1213 = vmatpush1.xpose.msra.mxu0 0.0
    %1214 = vmatprep.subr.mxu0 0.0
    %1215 = vmatpush1.xpose.msra.mxu0 0.0
    %1216 = vmatprep.subr.mxu0 0.0
    %1217 = vmatpush1.xpose.msra.mxu0 0.0
    %1218 = vmatprep.subr.mxu0 0.0
    %1219 = vmatpush1.xpose.msra.mxu0 0.0
    %1220 = vmatprep.subr.mxu0 0.0
    %1221 = vmatpush1.xpose.msra.mxu0 0.0
    %1222 = vmatprep.subr.mxu0 0.0
    %1223 = vmatpush1.xpose.msra.mxu0 0.0
    %1224 = vmatprep.subr.mxu0 0.0
    %1225 = vmatpush1.xpose.msra.mxu0 0.0
    %1226 = vmatprep.subr.mxu0 0.0
    %1227 = vmatpush1.xpose.msra.mxu0 0.0
    %1228 = vmatprep.subr.mxu0 0.0
    %1229 = vmatpush1.xpose.msra.mxu0 0.0
    %1230 = vmatprep.subr.mxu0 0.0
    %1231 = vmatpush1.xpose.msra.mxu0 0.0
    %1232 = vmatprep.subr.mxu0 0.0
    %1233 = vmatpush1.xpose.msra.mxu0 0.0
    %1234 = vmatprep.subr.mxu0 0.0
    %1235 = vmatpush1.xpose.msra.mxu0 0.0
    %1236 = vmatprep.subr.mxu0 0.0
    %1237 = vmatpush1.xpose.msra.mxu0 0.0
    %1238 = vmatprep.subr.mxu0 0.0
    %1239 = vmatpush1.xpose.msra.mxu0 0.0
    %1240 = vmatprep.subr.mxu0 0.0
    %1241 = vmatpush1.xpose.msra.mxu0 0.0
    %1242 = vmatprep.subr.mxu0 0.0
    %1243 = vmatpush1.xpose.msra.mxu0 0.0
    %1244 = vmatprep.subr.mxu0 0.0
    %1245 = vmatpush1.xpose.msra.mxu0 0.0
    %1246 = vmatprep.subr.mxu0 0.0
    %1247 = vmatpush1.xpose.msra.mxu0 0.0
    %1248 = vmatprep.subr.mxu0 0.0
    %1249 = vmatpush1.xpose.msra.mxu0 0.0
    %1250 = vmatprep.subr.mxu0 0.0
    %1251 = vmatpush1.xpose.msra.mxu0 0.0
    %1252 = vmatprep.subr.mxu0 0.0
    %1253 = vmatpush1.xpose.msra.mxu0 0.0
    %1254 = vmatprep.mubr.f32.mxu0 0.0
    %1255 = vmatmul.mubr.f32.gmra.mrb[0].mxu0 %v1186
    %v1256 = vpop.f32.mrb[0].mxu0
    %v1257 = vadd.f32 0.0, %v1256
    %v1258 = vpop.f32.mrb[0].mxu0
    %1259 = vdwg.mxu0
    %v1260 = vsel %vm281, %v1179, -inf
    %1261 = vmax.xlane.f32.xlu0 %v1260
    %v1262 = vpop.xlane.xlu0 %1261
    %v1263 = vsel %vm281, %v1257, -inf
    %1264 = vmax.xlane.f32.xlu0 %v1263
    %v1265 = vpop.xlane.xlu0 %1264
    %v1266 = vsub.f32 %v1179, %v1262
    %v1267 = vsub.f32 %v1257, %v1265
    %v1268 = vmul.f32 %v1266, 1.442695
    %v1269 = vpow.pop %v1268
    %v1270 = vmul.f32 %v1267, 1.442695
    %v1271 = vpow.pop %v1270
    %v1272 = vsel %vm281, %v1269, 0.0
    %1273 = vadd.xlane.f32.xlu0 %v1272
    %v1274 = vpop.xlane.xlu0 %1273
    %v1275 = vsel %vm281, %v1271, 0.0
    %1276 = vadd.xlane.f32.xlu0 %v1275
    %v1277 = vpop.xlane.xlu0 %1276
    %v1278 = vrcp.pop %v1274
    %v1279 = vrcp.pop %v1277
    %v1280 = vmul.f32 %v1269, %v1278
    %v1281 = vmul.f32 %v1271, %v1279
    %1282 = vrot.lane.b32.xlu0 %v260, 80
    %v1283 = vpop.permute.xlu0 %1282
    %v1286 = vsel %vm281, %v1280, 0
    %1288 = vmatprep.subr.mxu0 0.0
    %1289 = vmatpush1.msra.mxu0 %v1283
    %1290 = vmatprep.subr.mxu0 0.0
    %1291 = vmatpush1.msra.mxu0 0.0
    %1292 = vmatprep.subr.mxu0 0.0
    %1293 = vmatpush1.msra.mxu0 0.0
    %1294 = vmatprep.subr.mxu0 0.0
    %1295 = vmatpush1.msra.mxu0 0.0
    %1296 = vmatprep.subr.mxu0 0.0
    %1297 = vmatpush1.msra.mxu0 0.0
    %1298 = vmatprep.subr.mxu0 0.0
    %1299 = vmatpush1.msra.mxu0 0.0
    %1300 = vmatprep.subr.mxu0 0.0
    %1301 = vmatpush1.msra.mxu0 0.0
    %1302 = vmatprep.subr.mxu0 0.0
    %1303 = vmatpush1.msra.mxu0 0.0
    %1304 = vmatprep.subr.mxu0 0.0
    %1305 = vmatpush1.msra.mxu0 0.0
    %1306 = vmatprep.subr.mxu0 0.0
    %1307 = vmatpush1.msra.mxu0 0.0
    %1308 = vmatprep.subr.mxu0 0.0
    %1309 = vmatpush1.msra.mxu0 0.0
    %1310 = vmatprep.subr.mxu0 0.0
    %1311 = vmatpush1.msra.mxu0 0.0
    %1312 = vmatprep.subr.mxu0 0.0
    %1313 = vmatpush1.msra.mxu0 0.0
    %1314 = vmatprep.subr.mxu0 0.0
    %1315 = vmatpush1.msra.mxu0 0.0
    %1316 = vmatprep.subr.mxu0 0.0
    %1317 = vmatpush1.msra.mxu0 0.0
    %1318 = vmatprep.subr.mxu0 0.0
    %1319 = vmatpush1.msra.mxu0 0.0
    %1320 = vmatprep.subr.mxu0 0.0
    %1321 = vmatpush1.msra.mxu0 0.0
    %1322 = vmatprep.subr.mxu0 0.0
    %1323 = vmatpush1.msra.mxu0 0.0
    %1324 = vmatprep.subr.mxu0 0.0
    %1325 = vmatpush1.msra.mxu0 0.0
    %1326 = vmatprep.subr.mxu0 0.0
    %1327 = vmatpush1.msra.mxu0 0.0
    %1328 = vmatprep.subr.mxu0 0.0
    %1329 = vmatpush1.msra.mxu0 0.0
    %1330 = vmatprep.subr.mxu0 0.0
    %1331 = vmatpush1.msra.mxu0 0.0
    %1332 = vmatprep.subr.mxu0 0.0
    %1333 = vmatpush1.msra.mxu0 0.0
    %1334 = vmatprep.subr.mxu0 0.0
    %1335 = vmatpush1.msra.mxu0 0.0
    %1336 = vmatprep.subr.mxu0 0.0
    %1337 = vmatpush1.msra.mxu0 0.0
    %1338 = vmatprep.subr.mxu0 0.0
    %1339 = vmatpush1.msra.mxu0 0.0
    %1340 = vmatprep.subr.mxu0 0.0
    %1341 = vmatpush1.msra.mxu0 0.0
    %1342 = vmatprep.subr.mxu0 0.0
    %1343 = vmatpush1.msra.mxu0 0.0
    %1344 = vmatprep.subr.mxu0 0.0
    %1345 = vmatpush1.msra.mxu0 0.0
    %1346 = vmatprep.subr.mxu0 0.0
    %1347 = vmatpush1.msra.mxu0 0.0
    %1348 = vmatprep.subr.mxu0 0.0
    %1349 = vmatpush1.msra.mxu0 0.0
    %1350 = vmatprep.subr.mxu0 0.0
    %1351 = vmatpush1.msra.mxu0 0.0
    %1352 = vmatprep.mubr.f32.mxu0 0.0
    %1353 = vmatmul.mubr.f32.gmra.mrb[0].mxu0 %v1286
    %v1354 = vpop.f32.mrb[0].mxu0
    %v1355 = vadd.f32 0.0, %v1354
    %v1356 = vpop.f32.mrb[0].mxu0
    %1357 = vdwg.mxu0
    %1358 = vrot.lane.b32.xlu0 %v265, 80
    %v1359 = vpop.permute.xlu0 %1358
    %v1362 = vsel %vm281, %v1281, 0
    %1364 = vmatprep.subr.mxu0 0.0
    %1365 = vmatpush1.msra.mxu0 %v1359
    %1366 = vmatprep.subr.mxu0 0.0
    %1367 = vmatpush1.msra.mxu0 0.0
    %1368 = vmatprep.subr.mxu0 0.0
    %1369 = vmatpush1.msra.mxu0 0.0
    %1370 = vmatprep.subr.mxu0 0.0
    %1371 = vmatpush1.msra.mxu0 0.0
    %1372 = vmatprep.subr.mxu0 0.0
    %1373 = vmatpush1.msra.mxu0 0.0
    %1374 = vmatprep.subr.mxu0 0.0
    %1375 = vmatpush1.msra.mxu0 0.0
    %1376 = vmatprep.subr.mxu0 0.0
    %1377 = vmatpush1.msra.mxu0 0.0
    %1378 = vmatprep.subr.mxu0 0.0
    %1379 = vmatpush1.msra.mxu0 0.0
    %1380 = vmatprep.subr.mxu0 0.0
    %1381 = vmatpush1.msra.mxu0 0.0
    %1382 = vmatprep.subr.mxu0 0.0
    %1383 = vmatpush1.msra.mxu0 0.0
    %1384 = vmatprep.subr.mxu0 0.0
    %1385 = vmatpush1.msra.mxu0 0.0
    %1386 = vmatprep.subr.mxu0 0.0
    %1387 = vmatpush1.msra.mxu0 0.0
    %1388 = vmatprep.subr.mxu0 0.0
    %1389 = vmatpush1.msra.mxu0 0.0
    %1390 = vmatprep.subr.mxu0 0.0
    %1391 = vmatpush1.msra.mxu0 0.0
    %1392 = vmatprep.subr.mxu0 0.0
    %1393 = vmatpush1.msra.mxu0 0.0
    %1394 = vmatprep.subr.mxu0 0.0
    %1395 = vmatpush1.msra.mxu0 0.0
    %1396 = vmatprep.subr.mxu0 0.0
    %1397 = vmatpush1.msra.mxu0 0.0
    %1398 = vmatprep.subr.mxu0 0.0
    %1399 = vmatpush1.msra.mxu0 0.0
    %1400 = vmatprep.subr.mxu0 0.0
    %1401 = vmatpush1.msra.mxu0 0.0
    %1402 = vmatprep.subr.mxu0 0.0
    %1403 = vmatpush1.msra.mxu0 0.0
    %1404 = vmatprep.subr.mxu0 0.0
    %1405 = vmatpush1.msra.mxu0 0.0
    %1406 = vmatprep.subr.mxu0 0.0
    %1407 = vmatpush1.msra.mxu0 0.0
    %1408 = vmatprep.subr.mxu0 0.0
    %1409 = vmatpush1.msra.mxu0 0.0
    %1410 = vmatprep.subr.mxu0 0.0
    %1411 = vmatpush1.msra.mxu0 0.0
    %1412 = vmatprep.subr.mxu0 0.0
    %1413 = vmatpush1.msra.mxu0 0.0
    %1414 = vmatprep.subr.mxu0 0.0
    %1415 = vmatpush1.msra.mxu0 0.0
    %1416 = vmatprep.subr.mxu0 0.0
    %1417 = vmatpush1.msra.mxu0 0.0
    %1418 = vmatprep.subr.mxu0 0.0
    %1419 = vmatpush1.msra.mxu0 0.0
    %1420 = vmatprep.subr.mxu0 0.0
    %1421 = vmatpush1.msra.mxu0 0.0
    %1422 = vmatprep.subr.mxu0 0.0
    %1423 = vmatpush1.msra.mxu0 0.0
    %1424 = vmatprep.subr.mxu0 0.0
    %1425 = vmatpush1.msra.mxu0 0.0
    %1426 = vmatprep.subr.mxu0 0.0
    %1427 = vmatpush1.msra.mxu0 0.0
    %1428 = vmatprep.mubr.f32.mxu0 0.0
    %1429 = vmatmul.mubr.f32.gmra.mrb[0].mxu0 %v1362
    %v1430 = vpop.f32.mrb[0].mxu0
    %v1431 = vadd.f32 0.0, %v1430
    %v1432 = vpop.f32.mrb[0].mxu0
    %1433 = vdwg.mxu0
    %v1435 = vsel %vm281, %v1355, 0
    %v1438 = vsel %vm281, %v1431, 0
    %1440 = vmatprep.subr.mxu0 0.0
    %1441 = vmatpush1.msra.mxu0 %v270
    %1442 = vmatprep.subr.mxu0 0.0
    %1443 = vmatpush1.msra.mxu0 0.0
    %1444 = vmatprep.subr.mxu0 0.0
    %1445 = vmatpush1.msra.mxu0 0.0
    %1446 = vmatprep.subr.mxu0 0.0
    %1447 = vmatpush1.msra.mxu0 0.0
    %1448 = vmatprep.subr.mxu0 0.0
    %1449 = vmatpush1.msra.mxu0 0.0
    %1450 = vmatprep.subr.mxu0 0.0
    %1451 = vmatpush1.msra.mxu0 0.0
    %1452 = vmatprep.subr.mxu0 0.0
    %1453 = vmatpush1.msra.mxu0 0.0
    %1454 = vmatprep.subr.mxu0 0.0
    %1455 = vmatpush1.msra.mxu0 0.0
    %1456 = vmatprep.subr.mxu0 0.0
    %1457 = vmatpush1.msra.mxu0 0.0
    %1458 = vmatprep.subr.mxu0 0.0
    %1459 = vmatpush1.msra.mxu0 0.0
    %1460 = vmatprep.subr.mxu0 0.0
    %1461 = vmatpush1.msra.mxu0 0.0
    %1462 = vmatprep.subr.mxu0 0.0
    %1463 = vmatpush1.msra.mxu0 0.0
    %1464 = vmatprep.subr.mxu0 0.0
    %1465 = vmatpush1.msra.mxu0 0.0
    %1466 = vmatprep.subr.mxu0 0.0
    %1467 = vmatpush1.msra.mxu0 0.0
    %1468 = vmatprep.subr.mxu0 0.0
    %1469 = vmatpush1.msra.mxu0 0.0
    %1470 = vmatprep.subr.mxu0 0.0
    %1471 = vmatpush1.msra.mxu0 0.0
    %1472 = vmatprep.subr.mxu0 0.0
    %1473 = vmatpush1.msra.mxu0 0.0
    %1474 = vmatprep.subr.mxu0 0.0
    %1475 = vmatpush1.msra.mxu0 0.0
    %1476 = vmatprep.subr.mxu0 0.0
    %1477 = vmatpush1.msra.mxu0 0.0
    %1478 = vmatprep.subr.mxu0 0.0
    %1479 = vmatpush1.msra.mxu0 0.0
    %1480 = vmatprep.subr.mxu0 0.0
    %1481 = vmatpush1.msra.mxu0 0.0
    %1482 = vmatprep.subr.mxu0 0.0
    %1483 = vmatpush1.msra.mxu0 0.0
    %1484 = vmatprep.subr.mxu0 0.0
    %1485 = vmatpush1.msra.mxu0 0.0
    %1486 = vmatprep.subr.mxu0 0.0
    %1487 = vmatpush1.msra.mxu0 0.0
    %1488 = vmatprep.subr.mxu0 0.0
    %1489 = vmatpush1.msra.mxu0 0.0
    %1490 = vmatprep.subr.mxu0 0.0
    %1491 = vmatpush1.msra.mxu0 0.0
    %1492 = vmatprep.subr.mxu0 0.0
    %1493 = vmatpush1.msra.mxu0 0.0
    %1494 = vmatprep.subr.mxu0 0.0
    %1495 = vmatpush1.msra.mxu0 0.0
    %1496 = vmatprep.subr.mxu0 0.0
    %1497 = vmatpush1.msra.mxu0 0.0
    %1498 = vmatprep.subr.mxu0 0.0
    %1499 = vmatpush1.msra.mxu0 0.0
    %1500 = vmatprep.subr.mxu0 0.0
    %1501 = vmatpush1.msra.mxu0 0.0
    %1502 = vmatprep.subr.mxu0 0.0
    %1503 = vmatpush1.msra.mxu0 0.0
    %1504 = vmatprep.mubr.f32.mxu0 0.0
    %1505 = vmatmul.mubr.f32.gmra.mrb[0].mxu0 %v1435
    %v1506 = vpop.f32.mrb[0].mxu0
    %v1507 = vadd.f32 0.0, %v1506
    %v1508 = vpop.f32.mrb[0].mxu0
    %1509 = vmatprep.mubr.f32.mxu0 0.0
    %1510 = vmatmul.mubr.f32.gmra.mrb[0].mxu0 %v1438
    %v1511 = vpop.f32.mrb[0].mxu0
    %v1512 = vadd.f32 0.0, %v1511
    %v1513 = vpop.f32.mrb[0].mxu0
    %1514 = vdwg.mxu0
    %v1515 = vadd.f32 %v1102, %v1507
    %v1516 = vadd.f32 %v1103, %v1512
    %1517 = vrot.lane.b32.xlu0 %v182, 104
    %v1518 = vpop.permute.xlu0 %1517
    %1519 = vrot.lane.b32.xlu0 %v260, 104
    %v1520 = vpop.permute.xlu0 %1519
    %v1521 = vsel %vm281, %v1518, 0
    %v1523 = vsel %vm281, %v1520, 0
    %1525 = vmatprep.subr.mxu0 0.0
    %1526 = vmatpush1.xpose.msra.mxu0 %v1523
    %1527 = vmatprep.subr.mxu0 0.0
    %1528 = vmatpush1.xpose.msra.mxu0 0.0
    %1529 = vmatprep.subr.mxu0 0.0
    %1530 = vmatpush1.xpose.msra.mxu0 0.0
    %1531 = vmatprep.subr.mxu0 0.0
    %1532 = vmatpush1.xpose.msra.mxu0 0.0
    %1533 = vmatprep.subr.mxu0 0.0
    %1534 = vmatpush1.xpose.msra.mxu0 0.0
    %1535 = vmatprep.subr.mxu0 0.0
    %1536 = vmatpush1.xpose.msra.mxu0 0.0
    %1537 = vmatprep.subr.mxu0 0.0
    %1538 = vmatpush1.xpose.msra.mxu0 0.0
    %1539 = vmatprep.subr.mxu0 0.0
    %1540 = vmatpush1.xpose.msra.mxu0 0.0
    %1541 = vmatprep.subr.mxu0 0.0
    %1542 = vmatpush1.xpose.msra.mxu0 0.0
    %1543 = vmatprep.subr.mxu0 0.0
    %1544 = vmatpush1.xpose.msra.mxu0 0.0
    %1545 = vmatprep.subr.mxu0 0.0
    %1546 = vmatpush1.xpose.msra.mxu0 0.0
    %1547 = vmatprep.subr.mxu0 0.0
    %1548 = vmatpush1.xpose.msra.mxu0 0.0
    %1549 = vmatprep.subr.mxu0 0.0
    %1550 = vmatpush1.xpose.msra.mxu0 0.0
    %1551 = vmatprep.subr.mxu0 0.0
    %1552 = vmatpush1.xpose.msra.mxu0 0.0
    %1553 = vmatprep.subr.mxu0 0.0
    %1554 = vmatpush1.xpose.msra.mxu0 0.0
    %1555 = vmatprep.subr.mxu0 0.0
    %1556 = vmatpush1.xpose.msra.mxu0 0.0
    %1557 = vmatprep.subr.mxu0 0.0
    %1558 = vmatpush1.xpose.msra.mxu0 0.0
    %1559 = vmatprep.subr.mxu0 0.0
    %1560 = vmatpush1.xpose.msra.mxu0 0.0
    %1561 = vmatprep.subr.mxu0 0.0
    %1562 = vmatpush1.xpose.msra.mxu0 0.0
    %1563 = vmatprep.subr.mxu0 0.0
    %1564 = vmatpush1.xpose.msra.mxu0 0.0
    %1565 = vmatprep.subr.mxu0 0.0
    %1566 = vmatpush1.xpose.msra.mxu0 0.0
    %1567 = vmatprep.subr.mxu0 0.0
    %1568 = vmatpush1.xpose.msra.mxu0 0.0
    %1569 = vmatprep.subr.mxu0 0.0
    %1570 = vmatpush1.xpose.msra.mxu0 0.0
    %1571 = vmatprep.subr.mxu0 0.0
    %1572 = vmatpush1.xpose.msra.mxu0 0.0
    %1573 = vmatprep.subr.mxu0 0.0
    %1574 = vmatpush1.xpose.msra.mxu0 0.0
    %1575 = vmatprep.subr.mxu0 0.0
    %1576 = vmatpush1.xpose.msra.mxu0 0.0
    %1577 = vmatprep.subr.mxu0 0.0
    %1578 = vmatpush1.xpose.msra.mxu0 0.0
    %1579 = vmatprep.subr.mxu0 0.0
    %1580 = vmatpush1.xpose.msra.mxu0 0.0
    %1581 = vmatprep.subr.mxu0 0.0
    %1582 = vmatpush1.xpose.msra.mxu0 0.0
    %1583 = vmatprep.subr.mxu0 0.0
    %1584 = vmatpush1.xpose.msra.mxu0 0.0
    %1585 = vmatprep.subr.mxu0 0.0
    %1586 = vmatpush1.xpose.msra.mxu0 0.0
    %1587 = vmatprep.subr.mxu0 0.0
    %1588 = vmatpush1.xpose.msra.mxu0 0.0
    %1589 = vmatprep.mubr.f32.mxu0 0.0
    %1590 = vmatmul.mubr.f32.gmra.mrb[0].mxu0 %v1521
    %v1591 = vpop.f32.mrb[0].mxu0
    %v1592 = vadd.f32 0.0, %v1591
    %v1593 = vpop.f32.mrb[0].mxu0
    %1594 = vdwg.mxu0
    %1595 = vrot.lane.b32.xlu0 %v183, 104
    %v1596 = vpop.permute.xlu0 %1595
    %1597 = vrot.lane.b32.xlu0 %v265, 104
    %v1598 = vpop.permute.xlu0 %1597
    %v1599 = vsel %vm281, %v1596, 0
    %v1601 = vsel %vm281, %v1598, 0
    %1603 = vmatprep.subr.mxu0 0.0
    %1604 = vmatpush1.xpose.msra.mxu0 %v1601
    %1605 = vmatprep.subr.mxu0 0.0
    %1606 = vmatpush1.xpose.msra.mxu0 0.0
    %1607 = vmatprep.subr.mxu0 0.0
    %1608 = vmatpush1.xpose.msra.mxu0 0.0
    %1609 = vmatprep.subr.mxu0 0.0
    %1610 = vmatpush1.xpose.msra.mxu0 0.0
    %1611 = vmatprep.subr.mxu0 0.0
    %1612 = vmatpush1.xpose.msra.mxu0 0.0
    %1613 = vmatprep.subr.mxu0 0.0
    %1614 = vmatpush1.xpose.msra.mxu0 0.0
    %1615 = vmatprep.subr.mxu0 0.0
    %1616 = vmatpush1.xpose.msra.mxu0 0.0
    %1617 = vmatprep.subr.mxu0 0.0
    %1618 = vmatpush1.xpose.msra.mxu0 0.0
    %1619 = vmatprep.subr.mxu0 0.0
    %1620 = vmatpush1.xpose.msra.mxu0 0.0
    %1621 = vmatprep.subr.mxu0 0.0
    %1622 = vmatpush1.xpose.msra.mxu0 0.0
    %1623 = vmatprep.subr.mxu0 0.0
    %1624 = vmatpush1.xpose.msra.mxu0 0.0
    %1625 = vmatprep.subr.mxu0 0.0
    %1626 = vmatpush1.xpose.msra.mxu0 0.0
    %1627 = vmatprep.subr.mxu0 0.0
    %1628 = vmatpush1.xpose.msra.mxu0 0.0
    %1629 = vmatprep.subr.mxu0 0.0
    %1630 = vmatpush1.xpose.msra.mxu0 0.0
    %1631 = vmatprep.subr.mxu0 0.0
    %1632 = vmatpush1.xpose.msra.mxu0 0.0
    %1633 = vmatprep.subr.mxu0 0.0
    %1634 = vmatpush1.xpose.msra.mxu0 0.0
    %1635 = vmatprep.subr.mxu0 0.0
    %1636 = vmatpush1.xpose.msra.mxu0 0.0
    %1637 = vmatprep.subr.mxu0 0.0
    %1638 = vmatpush1.xpose.msra.mxu0 0.0
    %1639 = vmatprep.subr.mxu0 0.0
    %1640 = vmatpush1.xpose.msra.mxu0 0.0
    %1641 = vmatprep.subr.mxu0 0.0
    %1642 = vmatpush1.xpose.msra.mxu0 0.0
    %1643 = vmatprep.subr.mxu0 0.0
    %1644 = vmatpush1.xpose.msra.mxu0 0.0
    %1645 = vmatprep.subr.mxu0 0.0
    %1646 = vmatpush1.xpose.msra.mxu0 0.0
    %1647 = vmatprep.subr.mxu0 0.0
    %1648 = vmatpush1.xpose.msra.mxu0 0.0
    %1649 = vmatprep.subr.mxu0 0.0
    %1650 = vmatpush1.xpose.msra.mxu0 0.0
    %1651 = vmatprep.subr.mxu0 0.0
    %1652 = vmatpush1.xpose.msra.mxu0 0.0
    %1653 = vmatprep.subr.mxu0 0.0
    %1654 = vmatpush1.xpose.msra.mxu0 0.0
    %1655 = vmatprep.subr.mxu0 0.0
    %1656 = vmatpush1.xpose.msra.mxu0 0.0
    %1657 = vmatprep.subr.mxu0 0.0
    %1658 = vmatpush1.xpose.msra.mxu0 0.0
    %1659 = vmatprep.subr.mxu0 0.0
    %1660 = vmatpush1.xpose.msra.mxu0 0.0
    %1661 = vmatprep.subr.mxu0 0.0
    %1662 = vmatpush1.xpose.msra.mxu0 0.0
    %1663 = vmatprep.subr.mxu0 0.0
    %1664 = vmatpush1.xpose.msra.mxu0 0.0
    %1665 = vmatprep.subr.mxu0 0.0
    %1666 = vmatpush1.xpose.msra.mxu0 0.0
    %1667 = vmatprep.mubr.f32.mxu0 0.0
    %1668 = vmatmul.mubr.f32.gmra.mrb[0].mxu0 %v1599
    %v1669 = vpop.f32.mrb[0].mxu0
    %v1670 = vadd.f32 0.0, %v1669
    %v1671 = vpop.f32.mrb[0].mxu0
    %1672 = vdwg.mxu0
    %v1673 = vsel %vm281, %v1592, -inf
    %1674 = vmax.xlane.f32.xlu0 %v1673
    %v1675 = vpop.xlane.xlu0 %1674
    %v1676 = vsel %vm281, %v1670, -inf
    %1677 = vmax.xlane.f32.xlu0 %v1676
    %v1678 = vpop.xlane.xlu0 %1677
    %v1679 = vsub.f32 %v1592, %v1675
    %v1680 = vsub.f32 %v1670, %v1678
    %v1681 = vmul.f32 %v1679, 1.442695
    %v1682 = vpow.pop %v1681
    %v1683 = vmul.f32 %v1680, 1.442695
    %v1684 = vpow.pop %v1683
    %v1685 = vsel %vm281, %v1682, 0.0
    %1686 = vadd.xlane.f32.xlu0 %v1685
    %v1687 = vpop.xlane.xlu0 %1686
    %v1688 = vsel %vm281, %v1684, 0.0
    %1689 = vadd.xlane.f32.xlu0 %v1688
    %v1690 = vpop.xlane.xlu0 %1689
    %v1691 = vrcp.pop %v1687
    %v1692 = vrcp.pop %v1690
    %v1693 = vmul.f32 %v1682, %v1691
    %v1694 = vmul.f32 %v1684, %v1692
    %1695 = vrot.lane.b32.xlu0 %v260, 72
    %v1696 = vpop.permute.xlu0 %1695
    %v1699 = vsel %vm281, %v1693, 0
    %1701 = vmatprep.subr.mxu0 0.0
    %1702 = vmatpush1.msra.mxu0 %v1696
    %1703 = vmatprep.subr.mxu0 0.0
    %1704 = vmatpush1.msra.mxu0 0.0
    %1705 = vmatprep.subr.mxu0 0.0
    %1706 = vmatpush1.msra.mxu0 0.0
    %1707 = vmatprep.subr.mxu0 0.0
    %1708 = vmatpush1.msra.mxu0 0.0
    %1709 = vmatprep.subr.mxu0 0.0
    %1710 = vmatpush1.msra.mxu0 0.0
    %1711 = vmatprep.subr.mxu0 0.0
    %1712 = vmatpush1.msra.mxu0 0.0
    %1713 = vmatprep.subr.mxu0 0.0
    %1714 = vmatpush1.msra.mxu0 0.0
    %1715 = vmatprep.subr.mxu0 0.0
    %1716 = vmatpush1.msra.mxu0 0.0
    %1717 = vmatprep.subr.mxu0 0.0
    %1718 = vmatpush1.msra.mxu0 0.0
    %1719 = vmatprep.subr.mxu0 0.0
    %1720 = vmatpush1.msra.mxu0 0.0
    %1721 = vmatprep.subr.mxu0 0.0
    %1722 = vmatpush1.msra.mxu0 0.0
    %1723 = vmatprep.subr.mxu0 0.0
    %1724 = vmatpush1.msra.mxu0 0.0
    %1725 = vmatprep.subr.mxu0 0.0
    %1726 = vmatpush1.msra.mxu0 0.0
    %1727 = vmatprep.subr.mxu0 0.0
    %1728 = vmatpush1.msra.mxu0 0.0
    %1729 = vmatprep.subr.mxu0 0.0
    %1730 = vmatpush1.msra.mxu0 0.0
    %1731 = vmatprep.subr.mxu0 0.0
    %1732 = vmatpush1.msra.mxu0 0.0
    %1733 = vmatprep.subr.mxu0 0.0
    %1734 = vmatpush1.msra.mxu0 0.0
    %1735 = vmatprep.subr.mxu0 0.0
    %1736 = vmatpush1.msra.mxu0 0.0
    %1737 = vmatprep.subr.mxu0 0.0
    %1738 = vmatpush1.msra.mxu0 0.0
    %1739 = vmatprep.subr.mxu0 0.0
    %1740 = vmatpush1.msra.mxu0 0.0
    %1741 = vmatprep.subr.mxu0 0.0
    %1742 = vmatpush1.msra.mxu0 0.0
    %1743 = vmatprep.subr.mxu0 0.0
    %1744 = vmatpush1.msra.mxu0 0.0
    %1745 = vmatprep.subr.mxu0 0.0
    %1746 = vmatpush1.msra.mxu0 0.0
    %1747 = vmatprep.subr.mxu0 0.0
    %1748 = vmatpush1.msra.mxu0 0.0
    %1749 = vmatprep.subr.mxu0 0.0
    %1750 = vmatpush1.msra.mxu0 0.0
    %1751 = vmatprep.subr.mxu0 0.0
    %1752 = vmatpush1.msra.mxu0 0.0
    %1753 = vmatprep.subr.mxu0 0.0
    %1754 = vmatpush1.msra.mxu0 0.0
    %1755 = vmatprep.subr.mxu0 0.0
    %1756 = vmatpush1.msra.mxu0 0.0
    %1757 = vmatprep.subr.mxu0 0.0
    %1758 = vmatpush1.msra.mxu0 0.0
    %1759 = vmatprep.subr.mxu0 0.0
    %1760 = vmatpush1.msra.mxu0 0.0
    %1761 = vmatprep.subr.mxu0 0.0
    %1762 = vmatpush1.msra.mxu0 0.0
    %1763 = vmatprep.subr.mxu0 0.0
    %1764 = vmatpush1.msra.mxu0 0.0
    %1765 = vmatprep.mubr.f32.mxu0 0.0
    %1766 = vmatmul.mubr.f32.gmra.mrb[0].mxu0 %v1699
    %v1767 = vpop.f32.mrb[0].mxu0
    %v1768 = vadd.f32 0.0, %v1767
    %v1769 = vpop.f32.mrb[0].mxu0
    %1770 = vdwg.mxu0
    %1771 = vrot.lane.b32.xlu0 %v265, 72
    %v1772 = vpop.permute.xlu0 %1771
    %v1775 = vsel %vm281, %v1694, 0
    %1777 = vmatprep.subr.mxu0 0.0
    %1778 = vmatpush1.msra.mxu0 %v1772
    %1779 = vmatprep.subr.mxu0 0.0
    %1780 = vmatpush1.msra.mxu0 0.0
    %1781 = vmatprep.subr.mxu0 0.0
    %1782 = vmatpush1.msra.mxu0 0.0
    %1783 = vmatprep.subr.mxu0 0.0
    %1784 = vmatpush1.msra.mxu0 0.0
    %1785 = vmatprep.subr.mxu0 0.0
    %1786 = vmatpush1.msra.mxu0 0.0
    %1787 = vmatprep.subr.mxu0 0.0
    %1788 = vmatpush1.msra.mxu0 0.0
    %1789 = vmatprep.subr.mxu0 0.0
    %1790 = vmatpush1.msra.mxu0 0.0
    %1791 = vmatprep.subr.mxu0 0.0
    %1792 = vmatpush1.msra.mxu0 0.0
    %1793 = vmatprep.subr.mxu0 0.0
    %1794 = vmatpush1.msra.mxu0 0.0
    %1795 = vmatprep.subr.mxu0 0.0
    %1796 = vmatpush1.msra.mxu0 0.0
    %1797 = vmatprep.subr.mxu0 0.0
    %1798 = vmatpush1.msra.mxu0 0.0
    %1799 = vmatprep.subr.mxu0 0.0
    %1800 = vmatpush1.msra.mxu0 0.0
    %1801 = vmatprep.subr.mxu0 0.0
    %1802 = vmatpush1.msra.mxu0 0.0
    %1803 = vmatprep.subr.mxu0 0.0
    %1804 = vmatpush1.msra.mxu0 0.0
    %1805 = vmatprep.subr.mxu0 0.0
    %1806 = vmatpush1.msra.mxu0 0.0
    %1807 = vmatprep.subr.mxu0 0.0
    %1808 = vmatpush1.msra.mxu0 0.0
    %1809 = vmatprep.subr.mxu0 0.0
    %1810 = vmatpush1.msra.mxu0 0.0
    %1811 = vmatprep.subr.mxu0 0.0
    %1812 = vmatpush1.msra.mxu0 0.0
    %1813 = vmatprep.subr.mxu0 0.0
    %1814 = vmatpush1.msra.mxu0 0.0
    %1815 = vmatprep.subr.mxu0 0.0
    %1816 = vmatpush1.msra.mxu0 0.0
    %1817 = vmatprep.subr.mxu0 0.0
    %1818 = vmatpush1.msra.mxu0 0.0
    %1819 = vmatprep.subr.mxu0 0.0
    %1820 = vmatpush1.msra.mxu0 0.0
    %1821 = vmatprep.subr.mxu0 0.0
    %1822 = vmatpush1.msra.mxu0 0.0
    %1823 = vmatprep.subr.mxu0 0.0
    %1824 = vmatpush1.msra.mxu0 0.0
    %1825 = vmatprep.subr.mxu0 0.0
    %1826 = vmatpush1.msra.mxu0 0.0
    %1827 = vmatprep.subr.mxu0 0.0
    %1828 = vmatpush1.msra.mxu0 0.0
    %1829 = vmatprep.subr.mxu0 0.0
    %1830 = vmatpush1.msra.mxu0 0.0
    %1831 = vmatprep.subr.mxu0 0.0
    %1832 = vmatpush1.msra.mxu0 0.0
    %1833 = vmatprep.subr.mxu0 0.0
    %1834 = vmatpush1.msra.mxu0 0.0
    %1835 = vmatprep.subr.mxu0 0.0
    %1836 = vmatpush1.msra.mxu0 0.0
    %1837 = vmatprep.subr.mxu0 0.0
    %1838 = vmatpush1.msra.mxu0 0.0
    %1839 = vmatprep.subr.mxu0 0.0
    %1840 = vmatpush1.msra.mxu0 0.0
    %1841 = vmatprep.mubr.f32.mxu0 0.0
    %1842 = vmatmul.mubr.f32.gmra.mrb[0].mxu0 %v1775
    %v1843 = vpop.f32.mrb[0].mxu0
    %v1844 = vadd.f32 0.0, %v1843
    %v1845 = vpop.f32.mrb[0].mxu0
    %1846 = vdwg.mxu0
    %v1848 = vsel %vm281, %v1768, 0
    %v1851 = vsel %vm281, %v1844, 0
    %1853 = vmatprep.subr.mxu0 0.0
    %1854 = vmatpush1.msra.mxu0 %v271
    %1855 = vmatprep.subr.mxu0 0.0
    %1856 = vmatpush1.msra.mxu0 0.0
    %1857 = vmatprep.subr.mxu0 0.0
    %1858 = vmatpush1.msra.mxu0 0.0
    %1859 = vmatprep.subr.mxu0 0.0
    %1860 = vmatpush1.msra.mxu0 0.0
    %1861 = vmatprep.subr.mxu0 0.0
    %1862 = vmatpush1.msra.mxu0 0.0
    %1863 = vmatprep.subr.mxu0 0.0
    %1864 = vmatpush1.msra.mxu0 0.0
    %1865 = vmatprep.subr.mxu0 0.0
    %1866 = vmatpush1.msra.mxu0 0.0
    %1867 = vmatprep.subr.mxu0 0.0
    %1868 = vmatpush1.msra.mxu0 0.0
    %1869 = vmatprep.subr.mxu0 0.0
    %1870 = vmatpush1.msra.mxu0 0.0
    %1871 = vmatprep.subr.mxu0 0.0
    %1872 = vmatpush1.msra.mxu0 0.0
    %1873 = vmatprep.subr.mxu0 0.0
    %1874 = vmatpush1.msra.mxu0 0.0
    %1875 = vmatprep.subr.mxu0 0.0
    %1876 = vmatpush1.msra.mxu0 0.0
    %1877 = vmatprep.subr.mxu0 0.0
    %1878 = vmatpush1.msra.mxu0 0.0
    %1879 = vmatprep.subr.mxu0 0.0
    %1880 = vmatpush1.msra.mxu0 0.0
    %1881 = vmatprep.subr.mxu0 0.0
    %1882 = vmatpush1.msra.mxu0 0.0
    %1883 = vmatprep.subr.mxu0 0.0
    %1884 = vmatpush1.msra.mxu0 0.0
    %1885 = vmatprep.subr.mxu0 0.0
    %1886 = vmatpush1.msra.mxu0 0.0
    %1887 = vmatprep.subr.mxu0 0.0
    %1888 = vmatpush1.msra.mxu0 0.0
    %1889 = vmatprep.subr.mxu0 0.0
    %1890 = vmatpush1.msra.mxu0 0.0
    %1891 = vmatprep.subr.mxu0 0.0
    %1892 = vmatpush1.msra.mxu0 0.0
    %1893 = vmatprep.subr.mxu0 0.0
    %1894 = vmatpush1.msra.mxu0 0.0
    %1895 = vmatprep.subr.mxu0 0.0
    %1896 = vmatpush1.msra.mxu0 0.0
    %1897 = vmatprep.subr.mxu0 0.0
    %1898 = vmatpush1.msra.mxu0 0.0
    %1899 = vmatprep.subr.mxu0 0.0
    %1900 = vmatpush1.msra.mxu0 0.0
    %1901 = vmatprep.subr.mxu0 0.0
    %1902 = vmatpush1.msra.mxu0 0.0
    %1903 = vmatprep.subr.mxu0 0.0
    %1904 = vmatpush1.msra.mxu0 0.0
    %1905 = vmatprep.subr.mxu0 0.0
    %1906 = vmatpush1.msra.mxu0 0.0
    %1907 = vmatprep.subr.mxu0 0.0
    %1908 = vmatpush1.msra.mxu0 0.0
    %1909 = vmatprep.subr.mxu0 0.0
    %1910 = vmatpush1.msra.mxu0 0.0
    %1911 = vmatprep.subr.mxu0 0.0
    %1912 = vmatpush1.msra.mxu0 0.0
    %1913 = vmatprep.subr.mxu0 0.0
    %1914 = vmatpush1.msra.mxu0 0.0
    %1915 = vmatprep.subr.mxu0 0.0
    %1916 = vmatpush1.msra.mxu0 0.0
    %1917 = vmatprep.mubr.f32.mxu0 0.0
    %1918 = vmatmul.mubr.f32.gmra.mrb[0].mxu0 %v1848
    %v1919 = vpop.f32.mrb[0].mxu0
    %v1920 = vadd.f32 0.0, %v1919
    %v1921 = vpop.f32.mrb[0].mxu0
    %1922 = vmatprep.mubr.f32.mxu0 0.0
    %1923 = vmatmul.mubr.f32.gmra.mrb[0].mxu0 %v1851
    %v1924 = vpop.f32.mrb[0].mxu0
    %v1925 = vadd.f32 0.0, %v1924
    %v1926 = vpop.f32.mrb[0].mxu0
    %1927 = vdwg.mxu0
    %v1928 = vadd.f32 %v1515, %v1920
    %v1929 = vadd.f32 %v1516, %v1925
    %1930 = vst.msk [vmem:[#allocation11] sm:$0xff] %vm100, %v1928
    %1931 = vst.msk [vmem:[#allocation11 + $0x8] sm:$0xff] %vm100, %v1929
    // Predicated region
    $region46: #{tpu_custom_call.1} parent=1 // pred_check
      _
    $region47: #{tpu_custom_call.1} parent=1 // pred_check_branch
      %1933 = sbr.rel (0) target = $region49
    $region48: #{tpu_custom_call.1} parent=1 // pred_region
      %s1935 = ssub.s32 256, 256
      %1936 = vsyncadd [#allocation4], %s1935
      %s1937 = sshll.u32 [#allocation11], 4
      %s1938 = int_to_ptr.vmem [resolvable:$true] %s1937
      %1943 = dma.vmem_to_hbm [thread:$0]  %s1938, 256, %s6, [#allocation4], 128, 128, 8
    $region49: #{tpu_custom_call.1} parent=1 // pred_fallthru
      _
    // Predicated region
    $region50: #{tpu_custom_call.1} parent=1 // pred_check
      _
    $region51: #{tpu_custom_call.1} parent=1 // pred_check_branch
      %1945 = sbr.rel (0) target = $region53
    $region52: #{tpu_custom_call.1} parent=1 // pred_region
      %1946 = dma.done [#allocation4], 256
    $region53: #{tpu_custom_call.1} parent=1 // pred_fallthru
      _
    %1947 = vsyncpa [#allocation3], 1
    %1948 = vsyncpa [#allocation6], 1
    %1949 = vsyncpa [#allocation9], 1
    %1950 = vsyncpa [#allocation4], 1

</llo_original>
